<compile_context>
chip_gen: v5e
topology: v5e:2x2
jax: 0.10.0
libtpu: 0.0.40
codegen_flags: <defaults>
</compile_context>

<pallas_src>
import functools
import math

import jax
import jax.numpy as jnp
import numpy as np
from jax import lax
from jax.experimental import pallas as pl
from jax.experimental.pallas import tpu as pltpu


def _round_up(a, b):
    return (a + b - 1) // b * b


def _vmem_budget_bytes():
    """Generation-aware scoped-VMEM target (headroom below physical VMEM)."""
    try:
        kind = jax.devices()[0].device_kind.lower()
    except Exception:
        kind = ""
    if "v7" in kind:
        return 48 * 1024 * 1024          # v7x: 64 MiB physical per TensorCore
    if any(s in kind for s in ("v2", "v3", "v4", "v5", "v6", "trillium")):
        return 96 * 1024 * 1024          # 128 MiB physical parts
    return 48 * 1024 * 1024              # unknown: be conservative


def _sublane_pack(itemsize):
    return {4: 8, 2: 16, 1: 32}.get(itemsize, 8)


def _pick_tile(n_rows, k, gd, x_itemsize, budget, resident):
    """Largest row tile whose double-buffered x/q windows + temporaries fit VMEM."""
    sub = _sublane_pack(x_itemsize)
    avail = max(budget - resident, 2 * 1024 * 1024)
    per_row = (4 * gd * x_itemsize                 # x + q windows, double-buffered
               + 6 * max(k, 128) * 4               # (tile, K) distance / one-hot temps
               + 4 * max(gd, 128) * 4)             # (tile, gd) f32 temps
    cap = max(sub, min(1024, (avail // per_row) // sub * sub))
    if n_rows <= cap:
        return _round_up(max(n_rows, 1), sub)
    return cap


def _vq_kernel(factors_ref, x_ref, emb_init_ref, dwh_init_ref, csh_init_ref,
               q_ref, emb_ref, dwh_ref, csh_ref, loss_ref, ppl_ref,
               *scratch, n_rows, decay, epsilon, commitment_cost, training, use_cast):
    if use_cast:
        dw_s, counts_s, err_s, e2_s, e_cast_s, init_sem = scratch
    else:
        dw_s, counts_s, err_s, e2_s, init_sem = scratch
        e_cast_s = None

    g = pl.program_id(0)            # group index (sequential: shared codebook)
    t = pl.program_id(1)            # row-tile index within the group
    n_tiles = pl.num_programs(1)
    tile_rows = x_ref.shape[0]
    k, gd = emb_ref.shape

    # ---- one-time init: DMA codebook / EMA hidden state from HBM into the
    #      resident output windows (they ARE the live state for the whole grid) ----
    @pl.when((g == 0) & (t == 0))
    def _():
        cps = (pltpu.make_async_copy(emb_init_ref, emb_ref, init_sem.at[0]),
               pltpu.make_async_copy(dwh_init_ref, dwh_ref, init_sem.at[1]),
               pltpu.make_async_copy(csh_init_ref, csh_ref, init_sem.at[2]))
        for cp in cps:
            cp.start()
        for cp in cps:
            cp.wait()
        loss_ref[...] = jnp.zeros_like(loss_ref)
        ppl_ref[...] = jnp.zeros_like(ppl_ref)

    # ---- per-group init: cache codebook row norms (+ matmul-dtype copy), zero stats ----
    @pl.when(t == 0)
    def _():
        e32 = emb_ref[...]
        if use_cast:
            e_cast_s[...] = e32.astype(e_cast_s.dtype)
        e2_s[...] = jnp.sum(e32 * e32, axis=1, keepdims=True).T        # (1, K)
        if training:
            counts_s[...] = jnp.zeros_like(counts_s)
            dw_s[...] = jnp.zeros_like(dw_s)
            err_s[...] = jnp.zeros_like(err_s)

    # ---- quantize this (tile_rows, gd) slab with the *current* codebook ----
    x_nat = x_ref[...]
    masked = (n_rows % tile_rows) != 0            # static
    if masked:
        row = lax.broadcasted_iota(jnp.int32, (tile_rows, 1), 0) + t * tile_rows
        valid = row < n_rows
        # zero out-of-range rows of a partial tile (their window contents are undefined)
        x_nat = jnp.where(valid, x_nat, jnp.zeros_like(x_nat))

    e_nat = e_cast_s[...] if use_cast else emb_ref[...]               # (K, gd)
    xe = lax.dot_general(x_nat, e_nat, (((1,), (1,)), ((), ())),
                         preferred_element_type=jnp.float32)          # (tile, K)
    # ||x||^2 dropped: constant per row, argmin unchanged.
    d = e2_s[...] - 2.0 * xe

    dmin = jnp.min(d, axis=1, keepdims=True)
    col = lax.broadcasted_iota(jnp.int32, d.shape, 1)
    idx = jnp.min(jnp.where(d == dmin, col, k), axis=1, keepdims=True)  # first match
    onehot = col == idx
    if masked:
        onehot = jnp.logical_and(onehot, valid)
    enc_nat = onehot.astype(x_nat.dtype)

    q32 = lax.dot_general(enc_nat, e_nat, (((1,), (0,)), ((), ())),
                          preferred_element_type=jnp.float32)          # (tile, gd)
    q_ref[...] = q32.astype(q_ref.dtype)

    if training:
        # counts via XLU sublane reduce (lane-dense (1, K)) instead of a thin MXU pass
        counts_s[...] += jnp.sum(onehot.astype(jnp.float32), axis=0, keepdims=True)
        dw_s[...] += lax.dot_general(enc_nat, x_nat, (((0,), (0,)), ((), ())),
                                     preferred_element_type=jnp.float32)        # (K, gd)
        diff = x_nat.astype(jnp.float32) - q32
        err_s[...] += jnp.sum(jnp.sum(diff * diff, axis=0, keepdims=True),
                              axis=1, keepdims=True)                             # (1, 1)

        # ---- end of group: EMA update of the shared codebook, loss / perplexity ----
        @pl.when(t == n_tiles - 1)
        def _():
            one_minus = 1.0 - decay
            dwh_ref[...] = dwh_ref[...] - (dwh_ref[...] - dw_s[...]) * one_minus
            csh_ref[...] = csh_ref[...] - (csh_ref[...] - counts_s[...]) * one_minus
            inv_corr = 1.0 / factors_ref[g]          # 1 / (1 - decay**counter)
            upd_cs = csh_ref[...] * inv_corr                           # (1, K)
            nsum = jnp.sum(upd_cs, axis=1, keepdims=True)              # (1, 1)
            upd_cs = (upd_cs + epsilon) * (nsum / (nsum + k * epsilon))
            inv_cs = pl.reciprocal(upd_cs, approx=True)                # EUP, (1, K)
            upd_dw = dwh_ref[...] * inv_corr                           # (K, gd)
            emb_ref[...] = upd_dw * jnp.transpose(inv_cs)              # seen by group g+1

            loss_ref[...] += (commitment_cost / (n_rows * gd)) * err_s[...]
            avg = counts_s[...] * (1.0 / n_rows)                       # (1, K)
            ent = jnp.sum(avg * jnp.log(avg + 1e-6), axis=1, keepdims=True)
            ppl_ref[...] += jnp.exp(-ent)


@functools.partial(jax.jit, static_argnames=("group_num", "decay", "epsilon",
                                             "commitment_cost", "training"))
def _multi_vq_forward(x, embeddings, dw_hidden, cs_hidden, factors, *,
                      group_num, decay, epsilon, commitment_cost, training):
    orig_shape = x.shape
    d_model = orig_shape[-1]
    gd = d_model // group_num
    k = embeddings.shape[0]
    n_rows = math.prod(orig_shape[:-1])
    x_itemsize = jnp.dtype(x.dtype).itemsize
    use_cast = x.dtype != jnp.float32

    budget = _vmem_budget_bytes()
    resident = (3 * k * gd * 4                                   # emb / dwh windows + dw acc
                + (k * gd * x_itemsize if use_cast else 0)       # cached cast codebook
                + 8 * max(k, 128) * 4 + (1 << 20))               # small rows + slack
    tile = _pick_tile(n_rows, k, gd, x_itemsize, budget, resident)

    fast = (gd % 128 == 0) or (group_num == 1)
    if fast:
        # No host-side repack: column-slice BlockSpecs index (rows, D) directly.
        x_arg = x.reshape(n_rows, d_model)
        n_tiles = pl.cdiv(n_rows, tile)
        x_spec = pl.BlockSpec((tile, gd), lambda gi, ti: (ti, gi))
        q_spec = pl.BlockSpec((tile, gd), lambda gi, ti: (ti, gi))
        q_shape = jax.ShapeDtypeStruct((n_rows, d_model), x.dtype)
    else:
        # gd not lane-aligned: repack once to (G, rows, gd) so blocks stay dense.
        n_pad = _round_up(n_rows, tile)
        n_tiles = n_pad // tile
        x_arg = jnp.transpose(x.reshape(n_rows, group_num, gd), (1, 0, 2))
        if n_pad != n_rows:
            x_arg = jnp.pad(x_arg, ((0, 0), (0, n_pad - n_rows), (0, 0)))
        x_spec = pl.BlockSpec((None, tile, gd), lambda gi, ti: (gi, ti, 0))
        q_spec = pl.BlockSpec((None, tile, gd), lambda gi, ti: (gi, ti, 0))
        q_shape = jax.ShapeDtypeStruct((group_num, n_pad, gd), x.dtype)

    full = lambda gi, ti: (0, 0)
    kernel = functools.partial(
        _vq_kernel, n_rows=n_rows, decay=float(decay), epsilon=float(epsilon),
        commitment_cost=float(commitment_cost), training=training, use_cast=use_cast)

    scratch = [
        pltpu.VMEM((k, gd), jnp.float32),    # dw accumulator
        pltpu.VMEM((1, k), jnp.float32),     # counts accumulator (lane-dense)
        pltpu.VMEM((1, 1), jnp.float32),     # squared-error accumulator
        pltpu.VMEM((1, k), jnp.float32),     # cached codebook row norms
    ]
    if use_cast:
        scratch.append(pltpu.VMEM((k, gd), x.dtype))   # codebook cached in matmul dtype
    scratch.append(pltpu.SemaphoreType.DMA((3,)))      # one-time init DMAs

    outs = pl.pallas_call(
        kernel,
        grid=(group_num, n_tiles),
        in_specs=[
            pl.BlockSpec(memory_space=pltpu.MemorySpace.SMEM),   # EMA bias factors (G,)
            x_spec,
            pl.BlockSpec(memory_space=pl.ANY),                   # codebook init (HBM)
            pl.BlockSpec(memory_space=pl.ANY),                   # EMA dw hidden init (HBM)
            pl.BlockSpec(memory_space=pl.ANY),                   # EMA cluster-size init (HBM)
        ],
        out_specs=(
            q_spec,
            pl.BlockSpec((k, gd), full),     # codebook (resident live state)
            pl.BlockSpec((k, gd), full),     # EMA dw hidden (resident live state)
            pl.BlockSpec((1, k), full),      # EMA cluster-size hidden (resident)
            pl.BlockSpec((1, 1), full),      # sum of group losses
            pl.BlockSpec((1, 1), full),      # sum of group perplexities
        ),
        out_shape=(
            q_shape,
            jax.ShapeDtypeStruct((k, gd), jnp.float32),
            jax.ShapeDtypeStruct((k, gd), jnp.float32),
            jax.ShapeDtypeStruct((1, k), jnp.float32),
            jax.ShapeDtypeStruct((1, 1), jnp.float32),
            jax.ShapeDtypeStruct((1, 1), jnp.float32),
        ),
        scratch_shapes=scratch,
        compiler_params=pltpu.CompilerParams(
            dimension_semantics=("arbitrary", "arbitrary"),
            vmem_limit_bytes=int(budget)),
    )(factors, x_arg, embeddings, dw_hidden, cs_hidden)

    q_raw, emb_new, dwh_new, csh_new, loss_sum, ppl_sum = outs
    if fast:
        q = q_raw.reshape(orig_shape)
    else:
        q = jnp.transpose(q_raw[:, :n_rows, :], (1, 0, 2)).reshape(orig_shape)
    loss = loss_sum[0, 0] / group_num
    ppl = ppl_sum[0, 0] / group_num
    return q, loss, ppl, emb_new, dwh_new, csh_new


class MultiVectorQuantizerEMAPallas:
    """JAX/Pallas port of MultiVectorQuantizerEMA (forward pass).

    `nn.ModuleList([VectorQuantizerEMA(...)] * group_num)` repeats ONE module
    instance, so all groups share a single codebook + EMA buffers and the codebook
    update made while processing group g is visible to group g+1.  The fused kernel
    reproduces this by iterating the group grid axis sequentially with the
    codebook / EMA state resident in the VMEM output windows.
    """

    def __init__(self, num_embeddings, embedding_dim, group_num,
                 commitment_cost=0.25, decay=0.99, epsilon=1e-5, key=None):
        assert embedding_dim % group_num == 0
        self.group_dim = embedding_dim // group_num
        self.group_num = group_num
        self.num_embeddings = num_embeddings
        self.commitment_cost = float(commitment_cost)
        self.decay = float(decay)
        self.epsilon = float(epsilon)
        self.training = True
        if key is None:
            key = jax.random.PRNGKey(42)
        # deterministic stand-in for torch.randn(num_embeddings, group_dim)
        self.embeddings = jax.random.normal(
            key, (num_embeddings, self.group_dim), jnp.float32)
        # shared EMA state (one module instance repeated in the ModuleList)
        self.ema_dw_hidden = jnp.zeros((num_embeddings, self.group_dim), jnp.float32)
        self.ema_cs_hidden = jnp.zeros((1, num_embeddings), jnp.float32)
        self.ema_counter = 0   # both EMAs tick once per group per training forward

    def __call__(self, x):
        g = self.group_num
        if self.training:
            steps = self.ema_counter + 1 + np.arange(g, dtype=np.float64)
            factors = jnp.asarray(1.0 - self.decay ** steps, dtype=jnp.float32)
        else:
            factors = jnp.ones((g,), jnp.float32)

        q, loss, ppl, emb, dwh, csh = _multi_vq_forward(
            x, self.embeddings, self.ema_dw_hidden, self.ema_cs_hidden, factors,
            group_num=g, decay=self.decay, epsilon=self.epsilon,
            commitment_cost=self.commitment_cost, training=self.training)

        if self.training:
            self.embeddings = emb
            self.ema_dw_hidden = dwh
            self.ema_cs_hidden = csh
            self.ema_counter += g
            return q, loss, ppl
        return q, None, None


if __name__ == "__main__":
    key = jax.random.PRNGKey(0)
    k1, k2, k3, k4, k5, k6 = jax.random.split(key, 6)

    # --- fast path: lane-aligned group_dim (128), no host repack; row count not a
    #     multiple of the tile so the partial-tile masking is exercised ---
    B, T, D, K, G = 2, 13, 256, 128, 2
    x = jax.random.normal(k1, (B, T, D), jnp.float32)
    vq = MultiVectorQuantizerEMAPallas(K, D, G, key=k2)
    q, loss, ppl = vq(x)
    jax.block_until_ready((q, loss, ppl))
    assert q.shape == x.shape and q.dtype == x.dtype
    assert bool(jnp.isfinite(loss)) and bool(jnp.isfinite(ppl))
    q, loss, ppl = vq(x)            # second training step: EMA carried, cached jit reused
    jax.block_until_ready((q, loss, ppl))

    # --- fallback path: small group_dim (8) keeps the dense (G, rows, gd) repack ---
    B2, T2, D2, K2, G2 = 2, 16, 32, 16, 4
    x2 = jax.random.normal(k3, (B2, T2, D2), jnp.float32)
    vq2 = MultiVectorQuantizerEMAPallas(K2, D2, G2, key=k4)
    q2, loss2, ppl2 = vq2(x2)
    jax.block_until_ready((q2, loss2, ppl2))
    assert q2.shape == x2.shape
    assert bool(jnp.isfinite(loss2)) and bool(jnp.isfinite(ppl2))

    vq2.training = False            # eval: quantize only, no codebook update
    q2e, _, _ = vq2(x2)
    jax.block_until_ready(q2e)
    assert q2e.shape == x2.shape

    # --- bf16 input: exercises the cached matmul-dtype codebook (use_cast) path ---
    x3 = jax.random.normal(k5, (2, 16, 256), jnp.bfloat16)
    vq3 = MultiVectorQuantizerEMAPallas(128, 256, 2, key=k6)
    q3, loss3, ppl3 = vq3(x3)
    jax.block_until_ready((q3, loss3, ppl3))
    assert q3.shape == x3.shape and q3.dtype == x3.dtype
    assert bool(jnp.isfinite(loss3)) and bool(jnp.isfinite(ppl3))

    print("KERNEL_OK")
</pallas_src>

<mosaic_0001>
module attributes {stable_mosaic.version = 11 : i64} {
  func.func @_vq_kernel(%arg0: i32, %arg1: i32, %arg2: memref<2xf32, #tpu.memory_space<smem>>, %arg3: memref<32x128xf32, #tpu.memory_space<vmem>>, %arg4: memref<128x128xf32, #tpu.memory_space<any>>, %arg5: memref<128x128xf32, #tpu.memory_space<any>>, %arg6: memref<1x128xf32, #tpu.memory_space<any>>, %arg7: memref<32x128xf32, #tpu.memory_space<vmem>>, %arg8: memref<128x128xf32, #tpu.memory_space<vmem>>, %arg9: memref<128x128xf32, #tpu.memory_space<vmem>>, %arg10: memref<1x128xf32, #tpu.memory_space<vmem>>, %arg11: memref<1x1xf32, #tpu.memory_space<vmem>>, %arg12: memref<1x1xf32, #tpu.memory_space<vmem>>, %arg13: memref<128x128xf32, #tpu.memory_space<vmem>>, %arg14: memref<1x128xf32, #tpu.memory_space<vmem>>, %arg15: memref<1x1xf32, #tpu.memory_space<vmem>>, %arg16: memref<1x128xf32, #tpu.memory_space<vmem>>, %arg17: memref<3x!tpu.dma_semaphore, #tpu.memory_space<semaphore_mem>>) attributes {dimension_semantics = [#tpu.dimension_semantics<arbitrary>, #tpu.dimension_semantics<arbitrary>], iteration_bounds = array<i64: 2, 1>, scalar_prefetch = 0 : i64, scratch_operands = 5 : i64, tpu.core_type = #tpu.core_type<tc>, window_params = [{transform_indices = @transform_0, window_bounds = array<i64: 2>}, {transform_indices = @transform_1, window_bounds = array<i64: 32, 128>}, {}, {}, {}, {transform_indices = @transform_5, window_bounds = array<i64: 32, 128>}, {pipeline_mode = #tpu.pipeline_mode<synchronous>, transform_indices = @transform_6, window_bounds = array<i64: 128, 128>}, {pipeline_mode = #tpu.pipeline_mode<synchronous>, transform_indices = @transform_7, window_bounds = array<i64: 128, 128>}, {pipeline_mode = #tpu.pipeline_mode<synchronous>, transform_indices = @transform_8, window_bounds = array<i64: 1, 128>}, {pipeline_mode = #tpu.pipeline_mode<synchronous>, transform_indices = @transform_9, window_bounds = array<i64: 1, 1>}, {pipeline_mode = #tpu.pipeline_mode<synchronous>, transform_indices = @transform_10, window_bounds = array<i64: 1, 1>}]} {
    %c0_i32 = arith.constant 0 : i32
    %0 = arith.cmpi eq, %arg0, %c0_i32 : i32
    %c0_i32_0 = arith.constant 0 : i32
    %1 = arith.cmpi eq, %arg1, %c0_i32_0 : i32
    %2 = arith.andi %0, %1 : i1
    %3 = arith.extui %2 : i1 to i32
    %c0_i32_1 = arith.constant 0 : i32
    %4 = arith.cmpi ne, %3, %c0_i32_1 : i32
    scf.if %4 {
      %c0_i32_34 = arith.constant 0 : i32
      %66 = tpu.memref_slice %arg17[%c0_i32_34] : memref<3x!tpu.dma_semaphore, #tpu.memory_space<semaphore_mem>> -> memref<1x!tpu.dma_semaphore, #tpu.memory_space<semaphore_mem>>
      %67 = tpu.memref_squeeze %66 : memref<1x!tpu.dma_semaphore, #tpu.memory_space<semaphore_mem>> -> memref<!tpu.dma_semaphore, #tpu.memory_space<semaphore_mem>>
      tpu.enqueue_dma source(%arg4 : memref<128x128xf32, #tpu.memory_space<any>>) target(%arg8 : memref<128x128xf32, #tpu.memory_space<vmem>>) target_semaphore(%67 : memref<!tpu.dma_semaphore, #tpu.memory_space<semaphore_mem>>)
      %c1_i32 = arith.constant 1 : i32
      %68 = tpu.memref_slice %arg17[%c1_i32] : memref<3x!tpu.dma_semaphore, #tpu.memory_space<semaphore_mem>> -> memref<1x!tpu.dma_semaphore, #tpu.memory_space<semaphore_mem>>
      %69 = tpu.memref_squeeze %68 : memref<1x!tpu.dma_semaphore, #tpu.memory_space<semaphore_mem>> -> memref<!tpu.dma_semaphore, #tpu.memory_space<semaphore_mem>>
      tpu.enqueue_dma source(%arg5 : memref<128x128xf32, #tpu.memory_space<any>>) target(%arg9 : memref<128x128xf32, #tpu.memory_space<vmem>>) target_semaphore(%69 : memref<!tpu.dma_semaphore, #tpu.memory_space<semaphore_mem>>)
      %c2_i32 = arith.constant 2 : i32
      %70 = tpu.memref_slice %arg17[%c2_i32] : memref<3x!tpu.dma_semaphore, #tpu.memory_space<semaphore_mem>> -> memref<1x!tpu.dma_semaphore, #tpu.memory_space<semaphore_mem>>
      %71 = tpu.memref_squeeze %70 : memref<1x!tpu.dma_semaphore, #tpu.memory_space<semaphore_mem>> -> memref<!tpu.dma_semaphore, #tpu.memory_space<semaphore_mem>>
      tpu.enqueue_dma source(%arg6 : memref<1x128xf32, #tpu.memory_space<any>>) target(%arg10 : memref<1x128xf32, #tpu.memory_space<vmem>>) target_semaphore(%71 : memref<!tpu.dma_semaphore, #tpu.memory_space<semaphore_mem>>)
      %c0_i32_35 = arith.constant 0 : i32
      %72 = tpu.memref_slice %arg17[%c0_i32_35] : memref<3x!tpu.dma_semaphore, #tpu.memory_space<semaphore_mem>> -> memref<1x!tpu.dma_semaphore, #tpu.memory_space<semaphore_mem>>
      %73 = tpu.memref_squeeze %72 : memref<1x!tpu.dma_semaphore, #tpu.memory_space<semaphore_mem>> -> memref<!tpu.dma_semaphore, #tpu.memory_space<semaphore_mem>>
      tpu.wait_dma2 semaphore(%73 : memref<!tpu.dma_semaphore, #tpu.memory_space<semaphore_mem>>) src(%arg4 : memref<128x128xf32, #tpu.memory_space<any>>) dst(%arg8 : memref<128x128xf32, #tpu.memory_space<vmem>>)
      %c1_i32_36 = arith.constant 1 : i32
      %74 = tpu.memref_slice %arg17[%c1_i32_36] : memref<3x!tpu.dma_semaphore, #tpu.memory_space<semaphore_mem>> -> memref<1x!tpu.dma_semaphore, #tpu.memory_space<semaphore_mem>>
      %75 = tpu.memref_squeeze %74 : memref<1x!tpu.dma_semaphore, #tpu.memory_space<semaphore_mem>> -> memref<!tpu.dma_semaphore, #tpu.memory_space<semaphore_mem>>
      tpu.wait_dma2 semaphore(%75 : memref<!tpu.dma_semaphore, #tpu.memory_space<semaphore_mem>>) src(%arg5 : memref<128x128xf32, #tpu.memory_space<any>>) dst(%arg9 : memref<128x128xf32, #tpu.memory_space<vmem>>)
      %c2_i32_37 = arith.constant 2 : i32
      %76 = tpu.memref_slice %arg17[%c2_i32_37] : memref<3x!tpu.dma_semaphore, #tpu.memory_space<semaphore_mem>> -> memref<1x!tpu.dma_semaphore, #tpu.memory_space<semaphore_mem>>
      %77 = tpu.memref_squeeze %76 : memref<1x!tpu.dma_semaphore, #tpu.memory_space<semaphore_mem>> -> memref<!tpu.dma_semaphore, #tpu.memory_space<semaphore_mem>>
      tpu.wait_dma2 semaphore(%77 : memref<!tpu.dma_semaphore, #tpu.memory_space<semaphore_mem>>) src(%arg6 : memref<1x128xf32, #tpu.memory_space<any>>) dst(%arg10 : memref<1x128xf32, #tpu.memory_space<vmem>>)
      %cst_38 = arith.constant 0.000000e+00 : f32
      %78 = vector.broadcast %cst_38 : f32 to vector<1x1xf32>
      %c0_39 = arith.constant 0 : index
      %c0_40 = arith.constant 0 : index
      %79 = vector.load %arg11[%c0_39, %c0_40] : memref<1x1xf32, #tpu.memory_space<vmem>>, vector<1x1xf32>
      tpu.vector_store %arg11[%c0_39, %c0_40], %78 {strides = array<i32>} : memref<1x1xf32, #tpu.memory_space<vmem>>, vector<1x1xf32>,
      %cst_41 = arith.constant 0.000000e+00 : f32
      %80 = vector.broadcast %cst_41 : f32 to vector<1x1xf32>
      %c0_42 = arith.constant 0 : index
      %c0_43 = arith.constant 0 : index
      %81 = vector.load %arg12[%c0_42, %c0_43] : memref<1x1xf32, #tpu.memory_space<vmem>>, vector<1x1xf32>
      tpu.vector_store %arg12[%c0_42, %c0_43], %80 {strides = array<i32>} : memref<1x1xf32, #tpu.memory_space<vmem>>, vector<1x1xf32>,
    } else {
    }
    %c0_i32_2 = arith.constant 0 : i32
    %5 = arith.cmpi eq, %arg1, %c0_i32_2 : i32
    %6 = arith.extui %5 : i1 to i32
    %c0_i32_3 = arith.constant 0 : i32
    %7 = arith.cmpi ne, %6, %c0_i32_3 : i32
    scf.if %7 {
      %c0_34 = arith.constant 0 : index
      %c0_35 = arith.constant 0 : index
      %66 = vector.load %arg8[%c0_34, %c0_35] : memref<128x128xf32, #tpu.memory_space<vmem>>, vector<128x128xf32>
      %67 = arith.mulf %66, %66 : vector<128x128xf32>
      %cst_36 = arith.constant dense<0.000000e+00> : vector<128xf32>
      %68 = vector.multi_reduction <add>, %67, %cst_36 [1] : vector<128x128xf32> to vector<128xf32>
      %69 = vector.shape_cast %68 : vector<128xf32> to vector<128x1xf32>
      %70 = tpu.transpose %69, [1, 0] : vector<128x1xf32> -> vector<1x128xf32>
      %c0_37 = arith.constant 0 : index
      %c0_38 = arith.constant 0 : index
      %71 = vector.load %arg16[%c0_37, %c0_38] : memref<1x128xf32, #tpu.memory_space<vmem>>, vector<1x128xf32>
      tpu.vector_store %arg16[%c0_37, %c0_38], %70 {strides = array<i32>} : memref<1x128xf32, #tpu.memory_space<vmem>>, vector<1x128xf32>,
      %cst_39 = arith.constant 0.000000e+00 : f32
      %72 = vector.broadcast %cst_39 : f32 to vector<1x128xf32>
      %c0_40 = arith.constant 0 : index
      %c0_41 = arith.constant 0 : index
      %73 = vector.load %arg14[%c0_40, %c0_41] : memref<1x128xf32, #tpu.memory_space<vmem>>, vector<1x128xf32>
      tpu.vector_store %arg14[%c0_40, %c0_41], %72 {strides = array<i32>} : memref<1x128xf32, #tpu.memory_space<vmem>>, vector<1x128xf32>,
      %cst_42 = arith.constant 0.000000e+00 : f32
      %74 = vector.broadcast %cst_42 : f32 to vector<128x128xf32>
      %c0_43 = arith.constant 0 : index
      %c0_44 = arith.constant 0 : index
      %75 = vector.load %arg13[%c0_43, %c0_44] : memref<128x128xf32, #tpu.memory_space<vmem>>, vector<128x128xf32>
      tpu.vector_store %arg13[%c0_43, %c0_44], %74 {strides = array<i32>} : memref<128x128xf32, #tpu.memory_space<vmem>>, vector<128x128xf32>,
      %cst_45 = arith.constant 0.000000e+00 : f32
      %76 = vector.broadcast %cst_45 : f32 to vector<1x1xf32>
      %c0_46 = arith.constant 0 : index
      %c0_47 = arith.constant 0 : index
      %77 = vector.load %arg15[%c0_46, %c0_47] : memref<1x1xf32, #tpu.memory_space<vmem>>, vector<1x1xf32>
      tpu.vector_store %arg15[%c0_46, %c0_47], %76 {strides = array<i32>} : memref<1x1xf32, #tpu.memory_space<vmem>>, vector<1x1xf32>,
    } else {
    }
    %c0 = arith.constant 0 : index
    %c0_4 = arith.constant 0 : index
    %8 = vector.load %arg3[%c0, %c0_4] : memref<32x128xf32, #tpu.memory_space<vmem>>, vector<32x128xf32>
    %9 = tpu.iota {dimensions = array<i32: 0>} : vector<32x1xi32>
    %c32_i32 = arith.constant 32 : i32
    %10 = arith.muli %arg1, %c32_i32 : i32
    %11 = vector.broadcast %10 : i32 to vector<32x1xi32>
    %12 = arith.addi %9, %11 : vector<32x1xi32>
    %c26_i32 = arith.constant 26 : i32
    %13 = vector.broadcast %c26_i32 : i32 to vector<32x1xi32>
    %14 = arith.cmpi slt, %12, %13 : vector<32x1xi32>
    %cst = arith.constant 0.000000e+00 : f32
    %15 = vector.broadcast %cst : f32 to vector<32x128xf32>
    %16 = vector.shape_cast %14 : vector<32x1xi1> to vector<32x1xi1>
    %17 = vector.broadcast %16 : vector<32x1xi1> to vector<32x128xi1>
    %18 = arith.select %17, %8, %15 : vector<32x128xi1>, vector<32x128xf32>
    %c0_5 = arith.constant 0 : index
    %c0_6 = arith.constant 0 : index
    %19 = vector.load %arg8[%c0_5, %c0_6] : memref<128x128xf32, #tpu.memory_space<vmem>>, vector<128x128xf32>
    %cst_7 = arith.constant dense<0.000000e+00> : vector<32x128xf32>
    %20 = tpu.matmul %18, %19, %cst_7 {dimension_numbers = #tpu.dot_dimension_numbers<[1], [1], [0], [0], [0, 0, 1, 0], [], []>} : vector<32x128xf32>, vector<128x128xf32>, vector<32x128xf32> -> vector<32x128xf32>
    %c0_8 = arith.constant 0 : index
    %c0_9 = arith.constant 0 : index
    %21 = vector.load %arg16[%c0_8, %c0_9] : memref<1x128xf32, #tpu.memory_space<vmem>>, vector<1x128xf32>
    %cst_10 = arith.constant 2.000000e+00 : f32
    %22 = vector.broadcast %cst_10 : f32 to vector<32x128xf32>
    %23 = arith.mulf %22, %20 : vector<32x128xf32>
    %24 = vector.broadcast %21 : vector<1x128xf32> to vector<32x128xf32>
    %25 = arith.subf %24, %23 : vector<32x128xf32>
    %cst_11 = arith.constant dense<0x7F800000> : vector<32xf32>
    %26 = vector.multi_reduction <minimumf>, %25, %cst_11 [1] : vector<32x128xf32> to vector<32xf32>
    %27 = vector.shape_cast %26 : vector<32xf32> to vector<32x1xf32>
    %28 = tpu.iota {dimensions = array<i32: 1>} : vector<32x128xi32>
    %29 = vector.broadcast %27 : vector<32x1xf32> to vector<32x128xf32>
    %30 = arith.cmpf oeq, %25, %29 : vector<32x128xf32>
    %c128_i32 = arith.constant 128 : i32
    %31 = vector.broadcast %c128_i32 : i32 to vector<32x128xi32>
    %32 = arith.select %30, %28, %31 : vector<32x128xi1>, vector<32x128xi32>
    %cst_12 = arith.constant dense<2147483647> : vector<32xi32>
    %33 = vector.multi_reduction <minsi>, %32, %cst_12 [1] : vector<32x128xi32> to vector<32xi32>
    %34 = vector.shape_cast %33 : vector<32xi32> to vector<32x1xi32>
    %35 = vector.broadcast %34 : vector<32x1xi32> to vector<32x128xi32>
    %36 = arith.cmpi eq, %28, %35 : vector<32x128xi32>
    %37 = vector.broadcast %14 : vector<32x1xi1> to vector<32x128xi1>
    %38 = arith.andi %36, %37 : vector<32x128xi1>
    %39 = arith.extui %38 : vector<32x128xi1> to vector<32x128xi32>
    %40 = arith.sitofp %39 : vector<32x128xi32> to vector<32x128xf32>
    %cst_13 = arith.constant dense<0.000000e+00> : vector<32x128xf32>
    %41 = tpu.matmul %40, %19, %cst_13 {dimension_numbers = #tpu.dot_dimension_numbers<[1], [0], [0], [1], [0, 0, 1, 1], [], []>} : vector<32x128xf32>, vector<128x128xf32>, vector<32x128xf32> -> vector<32x128xf32>
    %c0_14 = arith.constant 0 : index
    %c0_15 = arith.constant 0 : index
    %42 = vector.load %arg7[%c0_14, %c0_15] : memref<32x128xf32, #tpu.memory_space<vmem>>, vector<32x128xf32>
    tpu.vector_store %arg7[%c0_14, %c0_15], %41 {strides = array<i32>} : memref<32x128xf32, #tpu.memory_space<vmem>>, vector<32x128xf32>,
    %c0_16 = arith.constant 0 : index
    %c0_17 = arith.constant 0 : index
    %43 = vector.load %arg14[%c0_16, %c0_17] : memref<1x128xf32, #tpu.memory_space<vmem>>, vector<1x128xf32>
    %44 = arith.extui %38 : vector<32x128xi1> to vector<32x128xi32>
    %45 = arith.sitofp %44 : vector<32x128xi32> to vector<32x128xf32>
    %cst_18 = arith.constant dense<0.000000e+00> : vector<128xf32>
    %46 = vector.multi_reduction <add>, %45, %cst_18 [0] : vector<32x128xf32> to vector<128xf32>
    %47 = vector.shape_cast %46 : vector<128xf32> to vector<1x128xf32>
    %48 = arith.addf %43, %47 : vector<1x128xf32>
    %c0_19 = arith.constant 0 : index
    %c0_20 = arith.constant 0 : index
    %49 = vector.load %arg14[%c0_19, %c0_20] : memref<1x128xf32, #tpu.memory_space<vmem>>, vector<1x128xf32>
    tpu.vector_store %arg14[%c0_19, %c0_20], %48 {strides = array<i32>} : memref<1x128xf32, #tpu.memory_space<vmem>>, vector<1x128xf32>,
    %c0_21 = arith.constant 0 : index
    %c0_22 = arith.constant 0 : index
    %50 = vector.load %arg13[%c0_21, %c0_22] : memref<128x128xf32, #tpu.memory_space<vmem>>, vector<128x128xf32>
    %cst_23 = arith.constant dense<0.000000e+00> : vector<128x128xf32>
    %51 = tpu.matmul %40, %18, %cst_23 {dimension_numbers = #tpu.dot_dimension_numbers<[0], [0], [1], [1], [0, 1, 1, 1], [], []>} : vector<32x128xf32>, vector<32x128xf32>, vector<128x128xf32> -> vector<128x128xf32>
    %52 = arith.addf %50, %51 : vector<128x128xf32>
    %c0_24 = arith.constant 0 : index
    %c0_25 = arith.constant 0 : index
    %53 = vector.load %arg13[%c0_24, %c0_25] : memref<128x128xf32, #tpu.memory_space<vmem>>, vector<128x128xf32>
    tpu.vector_store %arg13[%c0_24, %c0_25], %52 {strides = array<i32>} : memref<128x128xf32, #tpu.memory_space<vmem>>, vector<128x128xf32>,
    %54 = arith.subf %18, %41 : vector<32x128xf32>
    %c0_26 = arith.constant 0 : index
    %c0_27 = arith.constant 0 : index
    %55 = vector.load %arg15[%c0_26, %c0_27] : memref<1x1xf32, #tpu.memory_space<vmem>>, vector<1x1xf32>
    %56 = arith.mulf %54, %54 : vector<32x128xf32>
    %cst_28 = arith.constant dense<0.000000e+00> : vector<128xf32>
    %57 = vector.multi_reduction <add>, %56, %cst_28 [0] : vector<32x128xf32> to vector<128xf32>
    %58 = vector.shape_cast %57 : vector<128xf32> to vector<1x128xf32>
    %cst_29 = arith.constant dense<0.000000e+00> : vector<1xf32>
    %59 = vector.multi_reduction <add>, %58, %cst_29 [1] : vector<1x128xf32> to vector<1xf32>
    %60 = vector.shape_cast %59 : vector<1xf32> to vector<1x1xf32>
    %61 = arith.addf %55, %60 : vector<1x1xf32>
    %c0_30 = arith.constant 0 : index
    %c0_31 = arith.constant 0 : index
    %62 = vector.load %arg15[%c0_30, %c0_31] : memref<1x1xf32, #tpu.memory_space<vmem>>, vector<1x1xf32>
    tpu.vector_store %arg15[%c0_30, %c0_31], %61 {strides = array<i32>} : memref<1x1xf32, #tpu.memory_space<vmem>>, vector<1x1xf32>,
    %c0_i32_32 = arith.constant 0 : i32
    %63 = arith.cmpi eq, %arg1, %c0_i32_32 : i32
    %64 = arith.extui %63 : i1 to i32
    %c0_i32_33 = arith.constant 0 : i32
    %65 = arith.cmpi ne, %64, %c0_i32_33 : i32
    scf.if %65 {
      %c0_34 = arith.constant 0 : index
      %c0_35 = arith.constant 0 : index
      %66 = vector.load %arg9[%c0_34, %c0_35] : memref<128x128xf32, #tpu.memory_space<vmem>>, vector<128x128xf32>
      %c0_36 = arith.constant 0 : index
      %c0_37 = arith.constant 0 : index
      %67 = vector.load %arg9[%c0_36, %c0_37] : memref<128x128xf32, #tpu.memory_space<vmem>>, vector<128x128xf32>
      %c0_38 = arith.constant 0 : index
      %c0_39 = arith.constant 0 : index
      %68 = vector.load %arg13[%c0_38, %c0_39] : memref<128x128xf32, #tpu.memory_space<vmem>>, vector<128x128xf32>
      %69 = arith.subf %67, %68 : vector<128x128xf32>
      %cst_40 = arith.constant 0.00999999977 : f32
      %70 = vector.broadcast %cst_40 : f32 to vector<128x128xf32>
      %71 = arith.mulf %69, %70 : vector<128x128xf32>
      %72 = arith.subf %66, %71 : vector<128x128xf32>
      %c0_41 = arith.constant 0 : index
      %c0_42 = arith.constant 0 : index
      %73 = vector.load %arg9[%c0_41, %c0_42] : memref<128x128xf32, #tpu.memory_space<vmem>>, vector<128x128xf32>
      tpu.vector_store %arg9[%c0_41, %c0_42], %72 {strides = array<i32>} : memref<128x128xf32, #tpu.memory_space<vmem>>, vector<128x128xf32>,
      %c0_43 = arith.constant 0 : index
      %c0_44 = arith.constant 0 : index
      %74 = vector.load %arg10[%c0_43, %c0_44] : memref<1x128xf32, #tpu.memory_space<vmem>>, vector<1x128xf32>
      %c0_45 = arith.constant 0 : index
      %c0_46 = arith.constant 0 : index
      %75 = vector.load %arg10[%c0_45, %c0_46] : memref<1x128xf32, #tpu.memory_space<vmem>>, vector<1x128xf32>
      %c0_47 = arith.constant 0 : index
      %c0_48 = arith.constant 0 : index
      %76 = vector.load %arg14[%c0_47, %c0_48] : memref<1x128xf32, #tpu.memory_space<vmem>>, vector<1x128xf32>
      %77 = arith.subf %75, %76 : vector<1x128xf32>
      %cst_49 = arith.constant 0.00999999977 : f32
      %78 = vector.broadcast %cst_49 : f32 to vector<1x128xf32>
      %79 = arith.mulf %77, %78 : vector<1x128xf32>
      %80 = arith.subf %74, %79 : vector<1x128xf32>
      %c0_50 = arith.constant 0 : index
      %c0_51 = arith.constant 0 : index
      %81 = vector.load %arg10[%c0_50, %c0_51] : memref<1x128xf32, #tpu.memory_space<vmem>>, vector<1x128xf32>
      tpu.vector_store %arg10[%c0_50, %c0_51], %80 {strides = array<i32>} : memref<1x128xf32, #tpu.memory_space<vmem>>, vector<1x128xf32>,
      %82 = arith.index_cast %arg0 : i32 to index
      %83 = memref.load %arg2[%82] : memref<2xf32, #tpu.memory_space<smem>>
      %cst_52 = arith.constant 1.000000e+00 : f32
      %84 = arith.divf %cst_52, %83 : f32
      %c0_53 = arith.constant 0 : index
      %c0_54 = arith.constant 0 : index
      %85 = vector.load %arg10[%c0_53, %c0_54] : memref<1x128xf32, #tpu.memory_space<vmem>>, vector<1x128xf32>
      %86 = vector.broadcast %84 : f32 to vector<1x128xf32>
      %87 = arith.mulf %85, %86 : vector<1x128xf32>
      %cst_55 = arith.constant dense<0.000000e+00> : vector<1xf32>
      %88 = vector.multi_reduction <add>, %87, %cst_55 [1] : vector<1x128xf32> to vector<1xf32>
      %89 = vector.shape_cast %88 : vector<1xf32> to vector<1x1xf32>
      %cst_56 = arith.constant 9.99999974E-6 : f32
      %90 = vector.broadcast %cst_56 : f32 to vector<1x128xf32>
      %91 = arith.addf %87, %90 : vector<1x128xf32>
      %cst_57 = arith.constant 1.280000e-03 : f32
      %92 = vector.broadcast %cst_57 : f32 to vector<1x1xf32>
      %93 = arith.addf %89, %92 : vector<1x1xf32>
      %94 = arith.divf %89, %93 : vector<1x1xf32>
      %95 = vector.broadcast %94 : vector<1x1xf32> to vector<1x128xf32>
      %96 = arith.mulf %91, %95 : vector<1x128xf32>
      %97 = tpu.reciprocal %96 {approx = true} : vector<1x128xf32> -> vector<1x128xf32>
      %c0_58 = arith.constant 0 : index
      %c0_59 = arith.constant 0 : index
      %98 = vector.load %arg9[%c0_58, %c0_59] : memref<128x128xf32, #tpu.memory_space<vmem>>, vector<128x128xf32>
      %99 = vector.broadcast %84 : f32 to vector<128x128xf32>
      %100 = arith.mulf %98, %99 : vector<128x128xf32>
      %101 = tpu.transpose %97, [1, 0] : vector<1x128xf32> -> vector<128x1xf32>
      %102 = vector.broadcast %101 : vector<128x1xf32> to vector<128x128xf32>
      %103 = arith.mulf %100, %102 : vector<128x128xf32>
      %c0_60 = arith.constant 0 : index
      %c0_61 = arith.constant 0 : index
      %104 = vector.load %arg8[%c0_60, %c0_61] : memref<128x128xf32, #tpu.memory_space<vmem>>, vector<128x128xf32>
      tpu.vector_store %arg8[%c0_60, %c0_61], %103 {strides = array<i32>} : memref<128x128xf32, #tpu.memory_space<vmem>>, vector<128x128xf32>,
      %c0_62 = arith.constant 0 : index
      %c0_63 = arith.constant 0 : index
      %105 = vector.load %arg11[%c0_62, %c0_63] : memref<1x1xf32, #tpu.memory_space<vmem>>, vector<1x1xf32>
      %c0_64 = arith.constant 0 : index
      %c0_65 = arith.constant 0 : index
      %106 = vector.load %arg15[%c0_64, %c0_65] : memref<1x1xf32, #tpu.memory_space<vmem>>, vector<1x1xf32>
      %cst_66 = arith.constant 7.51201951E-5 : f32
      %107 = vector.broadcast %cst_66 : f32 to vector<1x1xf32>
      %108 = arith.mulf %107, %106 : vector<1x1xf32>
      %109 = arith.addf %105, %108 : vector<1x1xf32>
      %c0_67 = arith.constant 0 : index
      %c0_68 = arith.constant 0 : index
      %110 = vector.load %arg11[%c0_67, %c0_68] : memref<1x1xf32, #tpu.memory_space<vmem>>, vector<1x1xf32>
      tpu.vector_store %arg11[%c0_67, %c0_68], %109 {strides = array<i32>} : memref<1x1xf32, #tpu.memory_space<vmem>>, vector<1x1xf32>,
      %c0_69 = arith.constant 0 : index
      %c0_70 = arith.constant 0 : index
      %111 = vector.load %arg14[%c0_69, %c0_70] : memref<1x128xf32, #tpu.memory_space<vmem>>, vector<1x128xf32>
      %cst_71 = arith.constant 0.0384615399 : f32
      %112 = vector.broadcast %cst_71 : f32 to vector<1x128xf32>
      %113 = arith.mulf %111, %112 : vector<1x128xf32>
      %cst_72 = arith.constant 9.99999997E-7 : f32
      %114 = vector.broadcast %cst_72 : f32 to vector<1x128xf32>
      %115 = arith.addf %113, %114 : vector<1x128xf32>
      %116 = math.log %115 : vector<1x128xf32>
      %117 = arith.mulf %113, %116 : vector<1x128xf32>
      %cst_73 = arith.constant dense<0.000000e+00> : vector<1xf32>
      %118 = vector.multi_reduction <add>, %117, %cst_73 [1] : vector<1x128xf32> to vector<1xf32>
      %119 = vector.shape_cast %118 : vector<1xf32> to vector<1x1xf32>
      %c0_74 = arith.constant 0 : index
      %c0_75 = arith.constant 0 : index
      %120 = vector.load %arg12[%c0_74, %c0_75] : memref<1x1xf32, #tpu.memory_space<vmem>>, vector<1x1xf32>
      %cst_76 = arith.constant 0.000000e+00 : f32
      %121 = vector.broadcast %cst_76 : f32 to vector<1x1xf32>
      %122 = arith.subf %121, %119 : vector<1x1xf32>
      %123 = math.exp %122 : vector<1x1xf32>
      %124 = arith.addf %120, %123 : vector<1x1xf32>
      %c0_77 = arith.constant 0 : index
      %c0_78 = arith.constant 0 : index
      %125 = vector.load %arg12[%c0_77, %c0_78] : memref<1x1xf32, #tpu.memory_space<vmem>>, vector<1x1xf32>
      tpu.vector_store %arg12[%c0_77, %c0_78], %124 {strides = array<i32>} : memref<1x1xf32, #tpu.memory_space<vmem>>, vector<1x1xf32>,
    } else {
    }
    return
  }
  func.func @transform_0(%arg0: i32, %arg1: i32) -> i32 {
    %c0_i32 = arith.constant 0 : i32
    %c0_i32_0 = arith.constant 0 : i32
    return %c0_i32 : i32
  }
  func.func @transform_1(%arg0: i32, %arg1: i32) -> (i32, i32) {
    %c0_i32 = arith.constant 0 : i32
    return %arg1, %arg0 : i32, i32
  }
  func.func @transform_5(%arg0: i32, %arg1: i32) -> (i32, i32) {
    %c0_i32 = arith.constant 0 : i32
    return %arg1, %arg0 : i32, i32
  }
  func.func @transform_6(%arg0: i32, %arg1: i32) -> (i32, i32) {
    %c0_i32 = arith.constant 0 : i32
    %c0_i32_0 = arith.constant 0 : i32
    %c0_i32_1 = arith.constant 0 : i32
    return %c0_i32, %c0_i32_0 : i32, i32
  }
  func.func @transform_7(%arg0: i32, %arg1: i32) -> (i32, i32) {
    %c0_i32 = arith.constant 0 : i32
    %c0_i32_0 = arith.constant 0 : i32
    %c0_i32_1 = arith.constant 0 : i32
    return %c0_i32, %c0_i32_0 : i32, i32
  }
  func.func @transform_8(%arg0: i32, %arg1: i32) -> (i32, i32) {
    %c0_i32 = arith.constant 0 : i32
    %c0_i32_0 = arith.constant 0 : i32
    %c0_i32_1 = arith.constant 0 : i32
    return %c0_i32, %c0_i32_0 : i32, i32
  }
  func.func @transform_9(%arg0: i32, %arg1: i32) -> (i32, i32) {
    %c0_i32 = arith.constant 0 : i32
    %c0_i32_0 = arith.constant 0 : i32
    %c0_i32_1 = arith.constant 0 : i32
    return %c0_i32, %c0_i32_0 : i32, i32
  }
  func.func @transform_10(%arg0: i32, %arg1: i32) -> (i32, i32) {
    %c0_i32 = arith.constant 0 : i32
    %c0_i32_0 = arith.constant 0 : i32
    %c0_i32_1 = arith.constant 0 : i32
    return %c0_i32, %c0_i32_0 : i32, i32
  }
}

</mosaic_0001>

<llo_original>
// kernel: _multi_vq_forward.1
$region0: #{_multi_vq_forward.1}
  #allocation0 [shape = 'u32[]', space=smem, size = 0x4, offset = 0x4, fixed_abs, tag = 'smem constant byte address 0x4 - core index']
  #allocation1 [shape = 'u32[72,128]{1,0:T(1,128)}', space=vmem, size = 0x9000, scoped, tag = 'internal scratch']
  #allocation2 [shape = 'f32[128,128]{1,0:T(8,128)}', space=vmem, size = 0x10000, scoped, tag = 'scratch operand']
  #allocation3 [shape = 'f32[1,128]{1,0:T(1,128)}', space=vmem, size = 0x200, scoped, tag = 'scratch operand']
  #allocation4 [shape = 'f32[1,1]{1,0:T(1,128)}', space=vmem, size = 0x200, scoped, tag = 'scratch operand']
  #allocation5 [shape = 'f32[1,128]{1,0:T(1,128)}', space=vmem, size = 0x200, scoped, tag = 'scratch operand']
  #allocation6 [shape = 's32[3]{0}', space=sflag, size = 0xc, scoped, tag = 'scratch operand']
  #allocation19 [shape = 's32[]', space=sflag, size = 0x4, offset = 0, fixed_abs, tag = 'sflag constant byte address 0x0 - dummy sync flag']
  #allocation20 [shape = 's32[]', space=sflag, size = 0x4, offset = 0, fixed_abs, tag = 'sflag constant byte address 0x0 - dummy sync flag']
  #allocation21 [shape = 's32[]', space=sflag, size = 0x4, offset = 0, fixed_abs, tag = 'sflag constant byte address 0x0 - dummy sync flag']
  #allocation22 [shape = 'u32[]', space=smem, size = 0x4, offset = 0x44, fixed_abs, tag = 'smem constant byte address 0x44 - assertion arg 0']
  #allocation23 [shape = 'u32[]', space=smem, size = 0x4, offset = 0x48, fixed_abs, tag = 'smem constant byte address 0x48 - assertion arg 1']
  #allocation24 [shape = 's32[]', space=sflag, size = 0x4, offset = 0, fixed_abs, tag = 'sflag constant byte address 0x0 - dummy sync flag']
  %s0 = inlined_call_operand.vmem [shape: f32[2], index: 0, kind: input, shape index: {}]
  %s1 = inlined_call_operand.vmem [shape: f32[26,256], index: 1, kind: input, shape index: {}]
  %s2 = inlined_call_operand.vmem [shape: f32[128,128], index: 2, kind: input, shape index: {}]
  %s3 = inlined_call_operand.hbm [shape: f32[128,128], index: 3, kind: input, shape index: {}]
  %s4 = inlined_call_operand.vmem [shape: f32[1,128], index: 4, kind: input, shape index: {}]
  %s5 = inlined_call_operand.vmem [shape: f32[26,256], index: 5, kind: output, shape index: {0}]
  %s6 = inlined_call_operand.hbm [shape: f32[128,128], index: 6, kind: output, shape index: {1}]
  %s7 = inlined_call_operand.hbm [shape: f32[128,128], index: 7, kind: output, shape index: {2}]
  %s8 = inlined_call_operand.hbm [shape: f32[1,128], index: 8, kind: output, shape index: {3}]
  %s9 = inlined_call_operand.hbm [shape: f32[1,1], index: 9, kind: output, shape index: {4}]
  %s10 = inlined_call_operand.hbm [shape: f32[1,1], index: 10, kind: output, shape index: {5}]
  %11 = xla_tuple %s5, %s6, %s7, %s8, %s9, %s10
  %s12 = sld [smem:[#allocation0]]
  $region222: #{_multi_vq_forward.1} parent=0
    _
  %s14 = ssub.s32 1, %s12
  %s15 = scalar_select 0, %s14, %s12
  $region1: #{_multi_vq_forward.1} parent=0
    #allocation7 [shape = 'u8[512]{0}', space=smem, size = 0x200, scoped, tag = 'input window, operand 0, single buffered']
    #allocation8 [shape = 's32[2]{0}', space=sflag, size = 0x8, scoped, tag = 'scoped memory for _multi_vq_forward.1']
    #allocation9 [shape = 's32[2]{0}', space=sflag, size = 0x8, scoped, tag = 'scoped memory for _multi_vq_forward.1']
    #allocation10 [shape = 'u8[32768]{0}', space=vmem, size = 0x8000, scoped, tag = 'input window, operand 1']
    #allocation11 [shape = 'u8[32768]{0}', space=vmem, size = 0x8000, scoped, tag = 'output window, operand 0']
    #allocation12 [shape = 'u8[65536]{0}', space=vmem, size = 0x10000, scoped, tag = 'output window, operand 1, single buffered']
    #allocation13 [shape = 'u8[65536]{0}', space=vmem, size = 0x10000, scoped, tag = 'output window, operand 2, single buffered']
    #allocation14 [shape = 's32[1]{0}', space=sflag, size = 0x4, scoped, tag = 'scoped memory for _multi_vq_forward.1']
    #allocation15 [shape = 'u8[512]{0}', space=vmem, size = 0x400, scoped, tag = 'output window, operand 3, single buffered']
    #allocation16 [shape = 'u8[512]{0}', space=vmem, size = 0x400, scoped, tag = 'output window, operand 4, single buffered']
    #allocation17 [shape = 's32[1]{0}', space=sflag, size = 0x4, scoped, tag = 'scoped memory for _multi_vq_forward.1']
    #allocation18 [shape = 'u8[512]{0}', space=vmem, size = 0x400, scoped, tag = 'output window, operand 5, single buffered']
    %16 = vsyncpa [#allocation9], 0
    %17 = vsyncpa [#allocation8], 0
    %18 = vsyncpa [#allocation14], 0
    %19 = vsyncpa [#allocation17], 0
    loop: start=0, step=1, limit=4
    $region2: #{_multi_vq_forward.1} parent=1 // loop_pre_header
      _
    $region3: #{_multi_vq_forward.1} parent=1 // loop_header
      %s21 = sphi 0, %s25
      %p22 = scmp.ge.s32.totalorder %s21, 4
      %s28 = sphi 0, %s40
      %s29 = sphi 0, %s36
      %s30 = sphi 0, %s28
      %s31 = sphi 0, %s29
      %s32 = sphi 0, %s30
      %s33 = sphi 0, %s31
      %s41 = sphi 0, %s41
      %s43 = sphi 0, %s41
      %s44 = sphi 0, %s43
      %s58 = sphi 0, %s44
      %s66 = sphi 0, %s68
      %s69 = sphi 0, %s66
      %s70 = sphi 0, %s69
      %s86 = sphi 0, %s70
      %s94 = sphi 0, %s96
      %s97 = sphi 0, %s94
      %s98 = sphi 0, %s97
      %s114 = sphi 0, %s98
      %s118 = sphi 0, %s118
      %s120 = sphi 0, %s118
      %s121 = sphi 0, %s120
      %s135 = sphi 0, %s121
      %s139 = sphi 0, %s139
      %s141 = sphi 0, %s139
      %s142 = sphi 0, %s141
      %s156 = sphi 0, %s142
      %s160 = sphi 0, %s160
      %s162 = sphi 0, %s160
      %s163 = sphi 0, %s162
      %s177 = sphi 0, %s163
      %s181 = sphi 0, %s181
      %s183 = sphi 0, %s181
      %s184 = sphi 0, %s183
      %s198 = sphi 0, %s184
      %s202 = sphi 0, %s202
      %s204 = sphi 0, %s202
      %s205 = sphi 0, %s204
      %s219 = sphi 0, %s205
    $region4: #{_multi_vq_forward.1} parent=1 // loop_header_branch
      %24 = sbr.rel (%p22) target = $region8
    $region5: #{_multi_vq_forward.1} parent=1 // loop_body
      %s26 = ssub.s32 %s21, 1
      %s27 = ssub.s32 %s21, 2
      %s34 = sadd.s32 1, %s29
      %p35 = scmp.ge.s32.totalorder %s34, 1
      %s36 = scalar_select %p35, 0, %s34
      %s37 = sadd.s32 1, %s28
      %s38 = scalar_select %p35, %s37, %s28
      %p39 = scmp.ge.s32.totalorder %s38, 2
      %s40 = scalar_select %p39, 0, %s38
      %s42 = sadd.s32 %s41, 1
      %p45 = scmp.eq.s32.totalorder %s21, 1
      %p46 = scmp.ne.s32.totalorder %s41, %s43
      %p47 = scmp.eq.s32.totalorder %s21, 0
      %p48 = por %p46, %p47
      %p49 = scmp.ne.s32.totalorder %s41, %s43
      %p50 = scmp.eq.s32.totalorder %s26, 1
      %p51 = por %p49, %p50
      %p52 = scmp.ne.s32.totalorder %s43, %s44
      %p53 = scmp.eq.s32.totalorder %s26, 0
      %p54 = por %p52, %p53
      %p55 = scmp.ne.s32.totalorder %s43, %s44
      %p56 = scmp.eq.s32.totalorder %s27, 1
      %p57 = por %p55, %p56
      %p59 = scmp.ne.s32.totalorder %s44, %s58
      %p60 = scmp.eq.s32.totalorder %s27, 0
      %p61 = por %p59, %p60
      %s62 = ssub.s32 %s29, %s36
      %s63 = ssub.s32 %s28, %s40
      %s64 = sor.u32 %s62, %s63
      %p65 = scmp.eq.s32.totalorder %s64, 0
      %s67 = sadd.s32 %s66, 1
      %s68 = scalar_select %p65, %s66, %s67
      %p71 = pneg %p65
      %p72 = scmp.eq.s32.totalorder %s21, 1
      %p73 = por %p71, %p72
      %p74 = scmp.ne.s32.totalorder %s66, %s69
      %p75 = scmp.eq.s32.totalorder %s21, 0
      %p76 = por %p74, %p75
      %p77 = scmp.ne.s32.totalorder %s66, %s69
      %p78 = scmp.eq.s32.totalorder %s26, 1
      %p79 = por %p77, %p78
      %p80 = scmp.ne.s32.totalorder %s69, %s70
      %p81 = scmp.eq.s32.totalorder %s26, 0
      %p82 = por %p80, %p81
      %p83 = scmp.ne.s32.totalorder %s69, %s70
      %p84 = scmp.eq.s32.totalorder %s27, 1
      %p85 = por %p83, %p84
      %p87 = scmp.ne.s32.totalorder %s70, %s86
      %p88 = scmp.eq.s32.totalorder %s27, 0
      %p89 = por %p87, %p88
      %s90 = ssub.s32 %s29, %s36
      %s91 = ssub.s32 %s28, %s40
      %s92 = sor.u32 %s90, %s91
      %p93 = scmp.eq.s32.totalorder %s92, 0
      %s95 = sadd.s32 %s94, 1
      %s96 = scalar_select %p93, %s94, %s95
      %p99 = pneg %p93
      %p100 = scmp.eq.s32.totalorder %s21, 1
      %p101 = por %p99, %p100
      %p102 = scmp.ne.s32.totalorder %s94, %s97
      %p103 = scmp.eq.s32.totalorder %s21, 0
      %p104 = por %p102, %p103
      %p105 = scmp.ne.s32.totalorder %s94, %s97
      %p106 = scmp.eq.s32.totalorder %s26, 1
      %p107 = por %p105, %p106
      %p108 = scmp.ne.s32.totalorder %s97, %s98
      %p109 = scmp.eq.s32.totalorder %s26, 0
      %p110 = por %p108, %p109
      %p111 = scmp.ne.s32.totalorder %s97, %s98
      %p112 = scmp.eq.s32.totalorder %s27, 1
      %p113 = por %p111, %p112
      %p115 = scmp.ne.s32.totalorder %s98, %s114
      %p116 = scmp.eq.s32.totalorder %s27, 0
      %p117 = por %p115, %p116
      %s119 = sadd.s32 %s118, 1
      %p122 = scmp.eq.s32.totalorder %s21, 1
      %p123 = scmp.ne.s32.totalorder %s118, %s120
      %p124 = scmp.eq.s32.totalorder %s21, 0
      %p125 = por %p123, %p124
      %p126 = scmp.ne.s32.totalorder %s118, %s120
      %p127 = scmp.eq.s32.totalorder %s26, 1
      %p128 = por %p126, %p127
      %p129 = scmp.ne.s32.totalorder %s120, %s121
      %p130 = scmp.eq.s32.totalorder %s26, 0
      %p131 = por %p129, %p130
      %p132 = scmp.ne.s32.totalorder %s120, %s121
      %p133 = scmp.eq.s32.totalorder %s27, 1
      %p134 = por %p132, %p133
      %p136 = scmp.ne.s32.totalorder %s121, %s135
      %p137 = scmp.eq.s32.totalorder %s27, 0
      %p138 = por %p136, %p137
      %s140 = sadd.s32 %s139, 1
      %p143 = scmp.eq.s32.totalorder %s21, 1
      %p144 = scmp.ne.s32.totalorder %s139, %s141
      %p145 = scmp.eq.s32.totalorder %s21, 0
      %p146 = por %p144, %p145
      %p147 = scmp.ne.s32.totalorder %s139, %s141
      %p148 = scmp.eq.s32.totalorder %s26, 1
      %p149 = por %p147, %p148
      %p150 = scmp.ne.s32.totalorder %s141, %s142
      %p151 = scmp.eq.s32.totalorder %s26, 0
      %p152 = por %p150, %p151
      %p153 = scmp.ne.s32.totalorder %s141, %s142
      %p154 = scmp.eq.s32.totalorder %s27, 1
      %p155 = por %p153, %p154
      %p157 = scmp.ne.s32.totalorder %s142, %s156
      %p158 = scmp.eq.s32.totalorder %s27, 0
      %p159 = por %p157, %p158
      %s161 = sadd.s32 %s160, 1
      %p164 = scmp.eq.s32.totalorder %s21, 1
      %p165 = scmp.ne.s32.totalorder %s160, %s162
      %p166 = scmp.eq.s32.totalorder %s21, 0
      %p167 = por %p165, %p166
      %p168 = scmp.ne.s32.totalorder %s160, %s162
      %p169 = scmp.eq.s32.totalorder %s26, 1
      %p170 = por %p168, %p169
      %p171 = scmp.ne.s32.totalorder %s162, %s163
      %p172 = scmp.eq.s32.totalorder %s26, 0
      %p173 = por %p171, %p172
      %p174 = scmp.ne.s32.totalorder %s162, %s163
      %p175 = scmp.eq.s32.totalorder %s27, 1
      %p176 = por %p174, %p175
      %p178 = scmp.ne.s32.totalorder %s163, %s177
      %p179 = scmp.eq.s32.totalorder %s27, 0
      %p180 = por %p178, %p179
      %s182 = sadd.s32 %s181, 1
      %p185 = scmp.eq.s32.totalorder %s21, 1
      %p186 = scmp.ne.s32.totalorder %s181, %s183
      %p187 = scmp.eq.s32.totalorder %s21, 0
      %p188 = por %p186, %p187
      %p189 = scmp.ne.s32.totalorder %s181, %s183
      %p190 = scmp.eq.s32.totalorder %s26, 1
      %p191 = por %p189, %p190
      %p192 = scmp.ne.s32.totalorder %s183, %s184
      %p193 = scmp.eq.s32.totalorder %s26, 0
      %p194 = por %p192, %p193
      %p195 = scmp.ne.s32.totalorder %s183, %s184
      %p196 = scmp.eq.s32.totalorder %s27, 1
      %p197 = por %p195, %p196
      %p199 = scmp.ne.s32.totalorder %s184, %s198
      %p200 = scmp.eq.s32.totalorder %s27, 0
      %p201 = por %p199, %p200
      %s203 = sadd.s32 %s202, 1
      %p206 = scmp.eq.s32.totalorder %s21, 1
      %p207 = scmp.ne.s32.totalorder %s202, %s204
      %p208 = scmp.eq.s32.totalorder %s21, 0
      %p209 = por %p207, %p208
      %p210 = scmp.ne.s32.totalorder %s202, %s204
      %p211 = scmp.eq.s32.totalorder %s26, 1
      %p212 = por %p210, %p211
      %p213 = scmp.ne.s32.totalorder %s204, %s205
      %p214 = scmp.eq.s32.totalorder %s26, 0
      %p215 = por %p213, %p214
      %p216 = scmp.ne.s32.totalorder %s204, %s205
      %p217 = scmp.eq.s32.totalorder %s27, 1
      %p218 = por %p216, %p217
      %p220 = scmp.ne.s32.totalorder %s205, %s219
      %p221 = scmp.eq.s32.totalorder %s27, 0
      %p222 = por %p220, %p221
      %p223 = scmp.le.s32.totalorder 1, %s21
      %p224 = scmp.lt.s32.totalorder %s21, 3
      %p225 = pnand %p223, %p224
      %p226 = pneg %p225
      // Predicated region
      $region9: #{_multi_vq_forward.1} parent=5 // pred_check
        _
      $region10: #{_multi_vq_forward.1} parent=5 // pred_check_branch
        %228 = sbr.rel (%p225) target = $region12
      $region11: #{_multi_vq_forward.1} parent=5 // pred_region
        %s229 = ssub.s32 %s21, 1
        // Predicated region
        $region13: #{_multi_vq_forward.1} parent=11 // pred_check
          %p230 = pneg %p54
        $region14: #{_multi_vq_forward.1} parent=11 // pred_check_branch
          %232 = sbr.rel (%p230) target = $region16
        $region15: #{_multi_vq_forward.1} parent=11 // pred_region
          %234 = vsyncadd [#allocation9], 0
          %s236 = sshll.u32 %s0, 4
          %s237 = int_to_ptr.vmem [resolvable:$true] %s236
          %239 = dma.vmem_to_smem %s237, 16, [#allocation7], [#allocation9]
        $region16: #{_multi_vq_forward.1} parent=11 // pred_fallthru
          _
      $region12: #{_multi_vq_forward.1} parent=5 // pred_fallthru
        _
      %p240 = scmp.lt.s32.totalorder %s21, 2
      // Predicated region
      $region17: #{_multi_vq_forward.1} parent=5 // pred_check
        %p241 = pneg %p240
      $region18: #{_multi_vq_forward.1} parent=5 // pred_check_branch
        %243 = sbr.rel (%p241) target = $region20
      $region19: #{_multi_vq_forward.1} parent=5 // pred_region
        // Predicated region
        $region21: #{_multi_vq_forward.1} parent=19 // pred_check
          %p244 = pneg %p76
        $region22: #{_multi_vq_forward.1} parent=19 // pred_check_branch
          %246 = sbr.rel (%p244) target = $region24
        $region23: #{_multi_vq_forward.1} parent=19 // pred_region
          %s247 = sand.u32 %s66, 1
          %s248 = sand.u32 %s66, 1
          %s249 = smul.addr %s248, 32
          %s250 = scalar_lea.vmem [#allocation10], %s249
          %s251 = smul.u32 4, %s29
          %s252 = smul.addr %s251, 2
          %s253 = sadd.s32 %s28, %s252
          %s254 = smul.addr %s253, 8
          %s255 = scalar_lea.vmem %s1, %s254
          // Predicated region
          $region25: #{_multi_vq_forward.1} parent=23 // pred_check
            _
          $region26: #{_multi_vq_forward.1} parent=23 // pred_check_branch
            %257 = sbr.rel (0) target = $region28
          $region27: #{_multi_vq_forward.1} parent=23 // pred_region
            // Predicated region
            $region29: #{_multi_vq_forward.1} parent=27 // pred_check
              _
            $region30: #{_multi_vq_forward.1} parent=27 // pred_check_branch
              %259 = sbr.rel (0) target = $region32
            $region31: #{_multi_vq_forward.1} parent=27 // pred_region
              // Predicated region
              $region44: #{_multi_vq_forward.1} parent=31 // pred_check
                _
              $region45: #{_multi_vq_forward.1} parent=31 // pred_check_branch
                %281 = sbr.rel (0) target = $region47
              $region46: #{_multi_vq_forward.1} parent=31 // pred_region
                loop: start=0, step=1, limit=1
                $region48: #{_multi_vq_forward.1} parent=46 // loop_pre_header
                  _
                $region49: #{_multi_vq_forward.1} parent=46 // loop_header
                  %s283 = sphi 0, %s287
                  %p284 = scmp.ge.s32.totalorder %s283, 1
                  %s288 = sphi %s255, %s255
                  %s289 = sphi %s250, %s250
                $region50: #{_multi_vq_forward.1} parent=46 // loop_header_branch
                  %286 = sbr.rel (%p284) target = $region54
                $region51: #{_multi_vq_forward.1} parent=46 // loop_body
                  %v290 = vld [vmem:[%s288] sm:$0xff]
                  %291 = vst [vmem:[%s289] sm:$0xff] %v290
                  %v292 = vld [vmem:[%s288 + $0x10] sm:$0xff]
                  %293 = vst [vmem:[%s289 + $0x8] sm:$0xff] %v292
                  %v294 = vld [vmem:[%s288 + $0x20] sm:$0xff]
                  %295 = vst [vmem:[%s289 + $0x10] sm:$0xff] %v294
                  %v296 = vld [vmem:[%s288 + $0x30] sm:$0xff]
                  %297 = vst [vmem:[%s289 + $0x18] sm:$0xff] %v296
                $region52: #{_multi_vq_forward.1} parent=46 // loop_footer
                  %s287 = sadd.s32 1, %s283
                $region53: #{_multi_vq_forward.1} parent=46 // loop_footer_branch
                  %282 = sbr.rel target = $region49
                $region54: #{_multi_vq_forward.1} parent=46 // loop_exit
                  _
              $region47: #{_multi_vq_forward.1} parent=31 // pred_fallthru
                _
              // Predicated region
              $region55: #{_multi_vq_forward.1} parent=31 // pred_check
                _
              $region56: #{_multi_vq_forward.1} parent=31 // pred_check_branch
                %299 = sbr.rel target = $region58
              $region57: #{_multi_vq_forward.1} parent=31 // pred_region
                _
              $region58: #{_multi_vq_forward.1} parent=31 // pred_fallthru
                _
            $region32: #{_multi_vq_forward.1} parent=27 // pred_fallthru
              _
            // Predicated region
            $region33: #{_multi_vq_forward.1} parent=27 // pred_check
              _
            $region34: #{_multi_vq_forward.1} parent=27 // pred_check_branch
              %261 = sbr.rel target = $region36
            $region35: #{_multi_vq_forward.1} parent=27 // pred_region
              %s263 = ssub.s32 256, 1
              loop: start=0, step=1, limit=1
              $region37: #{_multi_vq_forward.1} parent=35 // loop_pre_header
                _
              $region38: #{_multi_vq_forward.1} parent=35 // loop_header
                %s265 = sphi 0, %s269
                %p266 = scmp.ge.s32.totalorder %s265, 1
                %s270 = sphi %s255, %s255
                %s271 = sphi %s250, %s250
              $region39: #{_multi_vq_forward.1} parent=35 // loop_header_branch
                %268 = sbr.rel (%p266) target = $region43
              $region40: #{_multi_vq_forward.1} parent=35 // loop_body
                %v272 = vld [vmem:[%s270] sm:%s263]
                %273 = vst [vmem:[%s271] sm:%s263] %v272
                %v274 = vld [vmem:[%s270 + $0x10] sm:%s263]
                %275 = vst [vmem:[%s271 + $0x8] sm:%s263] %v274
                %v276 = vld [vmem:[%s270 + $0x20] sm:%s263]
                %277 = vst [vmem:[%s271 + $0x10] sm:%s263] %v276
                %v278 = vld [vmem:[%s270 + $0x30] sm:%s263]
                %279 = vst [vmem:[%s271 + $0x18] sm:%s263] %v278
              $region41: #{_multi_vq_forward.1} parent=35 // loop_footer
                %s269 = sadd.s32 1, %s265
              $region42: #{_multi_vq_forward.1} parent=35 // loop_footer_branch
                %264 = sbr.rel target = $region38
              $region43: #{_multi_vq_forward.1} parent=35 // loop_exit
                _
            $region36: #{_multi_vq_forward.1} parent=27 // pred_fallthru
              _
          $region28: #{_multi_vq_forward.1} parent=23 // pred_fallthru
            _
          %300 = vnop
        $region24: #{_multi_vq_forward.1} parent=19 // pred_fallthru
          _
      $region20: #{_multi_vq_forward.1} parent=5 // pred_fallthru
        _
      %p301 = scmp.le.s32.totalorder 1, %s21
      %p302 = scmp.lt.s32.totalorder %s21, 3
      %p303 = pnand %p301, %p302
      %p304 = pneg %p303
      // Predicated region
      $region59: #{_multi_vq_forward.1} parent=5 // pred_check
        _
      $region60: #{_multi_vq_forward.1} parent=5 // pred_check_branch
        %306 = sbr.rel (%p303) target = $region62
      $region61: #{_multi_vq_forward.1} parent=5 // pred_region
        %s307 = ssub.s32 %s21, 1
        // Predicated region
        $region63: #{_multi_vq_forward.1} parent=61 // pred_check
          %p308 = pneg %p54
        $region64: #{_multi_vq_forward.1} parent=61 // pred_check_branch
          %310 = sbr.rel (%p308) target = $region66
        $region65: #{_multi_vq_forward.1} parent=61 // pred_region
          %312 = dma.done [#allocation9], 16
        $region66: #{_multi_vq_forward.1} parent=61 // pred_fallthru
          _
        %s313 = sand.u32 %s69, 1
        %s314 = sand.u32 %s69, 1
        %s315 = smul.addr %s314, 32
        %s316 = scalar_lea.vmem [#allocation10], %s315
        // Predicated region
        $region67: #{_multi_vq_forward.1} parent=61 // pred_check
          %p317 = pneg %p82
        $region68: #{_multi_vq_forward.1} parent=61 // pred_check_branch
          %319 = sbr.rel (%p317) target = $region70
        $region69: #{_multi_vq_forward.1} parent=61 // pred_region
          _
        $region70: #{_multi_vq_forward.1} parent=61 // pred_fallthru
          _
        %320 = sfence
        %p321 = pneg %p54
        %p322 = pneg %p51
        %s323 = sand.u32 %s69, 1
        %s324 = sand.u32 %s69, 1
        %s325 = smul.addr %s324, 32
        %s326 = scalar_lea.vmem [#allocation10], %s325
        %p327 = pneg %p82
        %p328 = pneg %p79
        %p329 = pneg %p110
        %p330 = pneg %p107
        %s331 = sand.u32 %s97, 1
        %s332 = sand.u32 %s97, 1
        %s333 = smul.addr %s332, 32
        %s334 = scalar_lea.vmem [#allocation11], %s333
        %p335 = pneg %p131
        %p336 = pneg %p128
        %p337 = pneg %p152
        %p338 = pneg %p149
        %p339 = pneg %p173
        %p340 = pneg %p170
        %p341 = pneg %p194
        %p342 = pneg %p191
        %p343 = pneg %p215
        %p344 = pneg %p212
        %s345 = smul.u32 4, %s31
        %s346 = smul.u32 4, %s31
        %p347 = scmp.eq.s32.totalorder %s30, 0
        %p348 = scmp.eq.s32.totalorder %s31, 0
        %p349 = pnand %p347, %p348
        %p350 = pneg %p349
        // Predicated region
        $region71: #{_multi_vq_forward.1} parent=61 // pred_check
          _
        $region72: #{_multi_vq_forward.1} parent=61 // pred_check_branch
          %352 = sbr.rel (%p349) target = $region74
        $region73: #{_multi_vq_forward.1} parent=61 // pred_region
          // Predicated region
          $region75: #{_multi_vq_forward.1} parent=73 // pred_check
            _
          $region76: #{_multi_vq_forward.1} parent=73 // pred_check_branch
            %354 = sbr.rel (0) target = $region78
          $region77: #{_multi_vq_forward.1} parent=73 // pred_region
            loop: start=0, step=1, limit=1
            $region79: #{_multi_vq_forward.1} parent=77 // loop_pre_header
              _
            $region80: #{_multi_vq_forward.1} parent=77 // loop_header
              %s356 = sphi 0, %s360
              %p357 = scmp.ge.s32.totalorder %s356, 1
              %s361 = sphi %s2, %s2
              %s362 = sphi [#allocation12], [#allocation12]
            $region81: #{_multi_vq_forward.1} parent=77 // loop_header_branch
              %359 = sbr.rel (%p357) target = $region85
            $region82: #{_multi_vq_forward.1} parent=77 // loop_body
              %v363 = vld [vmem:[%s361] sm:$0xff]
              %364 = vst [vmem:[%s362] sm:$0xff] %v363
              %v365 = vld [vmem:[%s361 + $0x8] sm:$0xff]
              %366 = vst [vmem:[%s362 + $0x8] sm:$0xff] %v365
              %v367 = vld [vmem:[%s361 + $0x10] sm:$0xff]
              %368 = vst [vmem:[%s362 + $0x10] sm:$0xff] %v367
              %v369 = vld [vmem:[%s361 + $0x18] sm:$0xff]
              %370 = vst [vmem:[%s362 + $0x18] sm:$0xff] %v369
              %v371 = vld [vmem:[%s361 + $0x20] sm:$0xff]
              %372 = vst [vmem:[%s362 + $0x20] sm:$0xff] %v371
              %v373 = vld [vmem:[%s361 + $0x28] sm:$0xff]
              %374 = vst [vmem:[%s362 + $0x28] sm:$0xff] %v373
              %v375 = vld [vmem:[%s361 + $0x30] sm:$0xff]
              %376 = vst [vmem:[%s362 + $0x30] sm:$0xff] %v375
              %v377 = vld [vmem:[%s361 + $0x38] sm:$0xff]
              %378 = vst [vmem:[%s362 + $0x38] sm:$0xff] %v377
              %v379 = vld [vmem:[%s361 + $0x40] sm:$0xff]
              %380 = vst [vmem:[%s362 + $0x40] sm:$0xff] %v379
              %v381 = vld [vmem:[%s361 + $0x48] sm:$0xff]
              %382 = vst [vmem:[%s362 + $0x48] sm:$0xff] %v381
              %v383 = vld [vmem:[%s361 + $0x50] sm:$0xff]
              %384 = vst [vmem:[%s362 + $0x50] sm:$0xff] %v383
              %v385 = vld [vmem:[%s361 + $0x58] sm:$0xff]
              %386 = vst [vmem:[%s362 + $0x58] sm:$0xff] %v385
              %v387 = vld [vmem:[%s361 + $0x60] sm:$0xff]
              %388 = vst [vmem:[%s362 + $0x60] sm:$0xff] %v387
              %v389 = vld [vmem:[%s361 + $0x68] sm:$0xff]
              %390 = vst [vmem:[%s362 + $0x68] sm:$0xff] %v389
              %v391 = vld [vmem:[%s361 + $0x70] sm:$0xff]
              %392 = vst [vmem:[%s362 + $0x70] sm:$0xff] %v391
              %v393 = vld [vmem:[%s361 + $0x78] sm:$0xff]
              %394 = vst [vmem:[%s362 + $0x78] sm:$0xff] %v393
            $region83: #{_multi_vq_forward.1} parent=77 // loop_footer
              %s360 = sadd.s32 1, %s356
            $region84: #{_multi_vq_forward.1} parent=77 // loop_footer_branch
              %355 = sbr.rel target = $region80
            $region85: #{_multi_vq_forward.1} parent=77 // loop_exit
              _
          $region78: #{_multi_vq_forward.1} parent=73 // pred_fallthru
            _
          // Predicated region
          $region86: #{_multi_vq_forward.1} parent=73 // pred_check
            _
          $region87: #{_multi_vq_forward.1} parent=73 // pred_check_branch
            %396 = sbr.rel target = $region89
          $region88: #{_multi_vq_forward.1} parent=73 // pred_region
            _
          $region89: #{_multi_vq_forward.1} parent=73 // pred_fallthru
            _
          // Predicated region
          $region90: #{_multi_vq_forward.1} parent=73 // pred_check
            _
          $region91: #{_multi_vq_forward.1} parent=73 // pred_check_branch
            %399 = sbr.rel (0) target = $region93
          $region92: #{_multi_vq_forward.1} parent=73 // pred_region
            %400 = vsyncadd [#allocation6], 2048
          $region93: #{_multi_vq_forward.1} parent=73 // pred_fallthru
            _
          %s401 = scalar_lea.sflag [#allocation6], 1
          // Predicated region
          $region94: #{_multi_vq_forward.1} parent=73 // pred_check
            _
          $region95: #{_multi_vq_forward.1} parent=73 // pred_check_branch
            %403 = sbr.rel target = $region97
          $region96: #{_multi_vq_forward.1} parent=73 // pred_region
            %404 = sst [smem:[#allocation22]] [#allocation21]
            %405 = sst [smem:[#allocation23]] [#allocation20]
          $region97: #{_multi_vq_forward.1} parent=73 // pred_fallthru
            _
          %407 = shalt.err (0)
          %s409 = sshll.u32 %s3, 4
          %s410 = int_to_ptr.hbm [resolvable:$true] %s409
          %s411 = sshll.u32 [#allocation13], 4
          %s412 = int_to_ptr.vmem [resolvable:$true] %s411
          %414 = dma.hbm_to_vmem [thread:$0]  %s410, 2048, %s412, %s401
          %s415 = scalar_lea.sflag [#allocation6], 2
          // Predicated region
          $region98: #{_multi_vq_forward.1} parent=73 // pred_check
            _
          $region99: #{_multi_vq_forward.1} parent=73 // pred_check_branch
            %417 = sbr.rel target = $region101
          $region100: #{_multi_vq_forward.1} parent=73 // pred_region
            // Predicated region
            $region113: #{_multi_vq_forward.1} parent=100 // pred_check
              _
            $region114: #{_multi_vq_forward.1} parent=100 // pred_check_branch
              %433 = sbr.rel (0) target = $region116
            $region115: #{_multi_vq_forward.1} parent=100 // pred_region
              %s435 = ssub.s32 2, 1
              loop: start=0, step=1, limit=1
              $region117: #{_multi_vq_forward.1} parent=115 // loop_pre_header
                _
              $region118: #{_multi_vq_forward.1} parent=115 // loop_header
                %s437 = sphi 0, %s441
                %p438 = scmp.ge.s32.totalorder %s437, 1
                %s442 = sphi %s4, %s4
                %s443 = sphi [#allocation15], [#allocation15]
              $region119: #{_multi_vq_forward.1} parent=115 // loop_header_branch
                %440 = sbr.rel (%p438) target = $region123
              $region120: #{_multi_vq_forward.1} parent=115 // loop_body
                %v444 = vld [vmem:[%s442] sm:%s435]
                %445 = vst [vmem:[%s443] sm:%s435] %v444
              $region121: #{_multi_vq_forward.1} parent=115 // loop_footer
                %s441 = sadd.s32 1, %s437
              $region122: #{_multi_vq_forward.1} parent=115 // loop_footer_branch
                %436 = sbr.rel target = $region118
              $region123: #{_multi_vq_forward.1} parent=115 // loop_exit
                _
            $region116: #{_multi_vq_forward.1} parent=100 // pred_fallthru
              _
          $region101: #{_multi_vq_forward.1} parent=73 // pred_fallthru
            _
          // Predicated region
          $region102: #{_multi_vq_forward.1} parent=73 // pred_check
            _
          $region103: #{_multi_vq_forward.1} parent=73 // pred_check_branch
            %419 = sbr.rel (0) target = $region105
          $region104: #{_multi_vq_forward.1} parent=73 // pred_region
            %s421 = ssub.s32 2, 1
            loop: start=0, step=1, limit=1
            $region106: #{_multi_vq_forward.1} parent=104 // loop_pre_header
              _
            $region107: #{_multi_vq_forward.1} parent=104 // loop_header
              %s423 = sphi 0, %s427
              %p424 = scmp.ge.s32.totalorder %s423, 1
              %s428 = sphi %s4, %s4
              %s429 = sphi [#allocation15], [#allocation15]
            $region108: #{_multi_vq_forward.1} parent=104 // loop_header_branch
              %426 = sbr.rel (%p424) target = $region112
            $region109: #{_multi_vq_forward.1} parent=104 // loop_body
              %v430 = vld [vmem:[%s428] sm:%s421]
              %431 = vst [vmem:[%s429] sm:%s421] %v430
            $region110: #{_multi_vq_forward.1} parent=104 // loop_footer
              %s427 = sadd.s32 1, %s423
            $region111: #{_multi_vq_forward.1} parent=104 // loop_footer_branch
              %422 = sbr.rel target = $region107
            $region112: #{_multi_vq_forward.1} parent=104 // loop_exit
              _
          $region105: #{_multi_vq_forward.1} parent=73 // pred_fallthru
            _
          // Predicated region
          $region124: #{_multi_vq_forward.1} parent=73 // pred_check
            _
          $region125: #{_multi_vq_forward.1} parent=73 // pred_check_branch
            %448 = sbr.rel (0) target = $region127
          $region126: #{_multi_vq_forward.1} parent=73 // pred_region
            %449 = vsyncadd %s415, 16
          $region127: #{_multi_vq_forward.1} parent=73 // pred_fallthru
            _
          %s450 = smul.u32 128, 1
          %s451 = sshll.u32 %s450, 4
          %452 = dma.done [#allocation6], %s451
          %s453 = sshll.u32 %s450, 4
          %454 = dma.done %s401, %s453
          %s455 = smul.u32 1, 1
          %s456 = sshll.u32 %s455, 4
          %457 = dma.done %s415, %s456
          %vm458 = vcmask 0
          %459 = vst.msk [vmem:[#allocation16] sm:$0x1] %vm458, 0.0
          %460 = vst.msk [vmem:[#allocation18] sm:$0x1] %vm458, 0.0
        $region74: #{_multi_vq_forward.1} parent=61 // pred_fallthru
          _
        // Predicated region
        $region128: #{_multi_vq_forward.1} parent=61 // pred_check
          %p461 = pneg %p348
        $region129: #{_multi_vq_forward.1} parent=61 // pred_check_branch
          %463 = sbr.rel (%p461) target = $region131
        $region130: #{_multi_vq_forward.1} parent=61 // pred_region
          %v464 = vld [vmem:[#allocation12] sm:$0xff]
          %v465 = vld [vmem:[#allocation12 + $0x8] sm:$0xff]
          %v466 = vld [vmem:[#allocation12 + $0x10] sm:$0xff]
          %v467 = vld [vmem:[#allocation12 + $0x18] sm:$0xff]
          %v468 = vld [vmem:[#allocation12 + $0x20] sm:$0xff]
          %v469 = vld [vmem:[#allocation12 + $0x28] sm:$0xff]
          %v470 = vld [vmem:[#allocation12 + $0x30] sm:$0xff]
          %v471 = vld [vmem:[#allocation12 + $0x38] sm:$0xff]
          %v472 = vld [vmem:[#allocation12 + $0x40] sm:$0xff]
          %v473 = vld [vmem:[#allocation12 + $0x48] sm:$0xff]
          %v474 = vld [vmem:[#allocation12 + $0x50] sm:$0xff]
          %v475 = vld [vmem:[#allocation12 + $0x58] sm:$0xff]
          %v476 = vld [vmem:[#allocation12 + $0x60] sm:$0xff]
          %v477 = vld [vmem:[#allocation12 + $0x68] sm:$0xff]
          %v478 = vld [vmem:[#allocation12 + $0x70] sm:$0xff]
          %v479 = vld [vmem:[#allocation12 + $0x78] sm:$0xff]
          %v480 = vmul.f32 %v464, %v464
          %v481 = vmul.f32 %v465, %v465
          %v482 = vmul.f32 %v466, %v466
          %v483 = vmul.f32 %v467, %v467
          %v484 = vmul.f32 %v468, %v468
          %v485 = vmul.f32 %v469, %v469
          %v486 = vmul.f32 %v470, %v470
          %v487 = vmul.f32 %v471, %v471
          %v488 = vmul.f32 %v472, %v472
          %v489 = vmul.f32 %v473, %v473
          %v490 = vmul.f32 %v474, %v474
          %v491 = vmul.f32 %v475, %v475
          %v492 = vmul.f32 %v476, %v476
          %v493 = vmul.f32 %v477, %v477
          %v494 = vmul.f32 %v478, %v478
          %v495 = vmul.f32 %v479, %v479
          %496 = vadd.xlane.f32.xlu0 %v480
          %v497 = vpop.xlane.xlu0 %496
          %498 = vadd.xlane.f32.xlu0 %v481
          %v499 = vpop.xlane.xlu0 %498
          %500 = vadd.xlane.f32.xlu0 %v482
          %v501 = vpop.xlane.xlu0 %500
          %502 = vadd.xlane.f32.xlu0 %v483
          %v503 = vpop.xlane.xlu0 %502
          %504 = vadd.xlane.f32.xlu0 %v484
          %v505 = vpop.xlane.xlu0 %504
          %506 = vadd.xlane.f32.xlu0 %v485
          %v507 = vpop.xlane.xlu0 %506
          %508 = vadd.xlane.f32.xlu0 %v486
          %v509 = vpop.xlane.xlu0 %508
          %510 = vadd.xlane.f32.xlu0 %v487
          %v511 = vpop.xlane.xlu0 %510
          %512 = vadd.xlane.f32.xlu0 %v488
          %v513 = vpop.xlane.xlu0 %512
          %514 = vadd.xlane.f32.xlu0 %v489
          %v515 = vpop.xlane.xlu0 %514
          %516 = vadd.xlane.f32.xlu0 %v490
          %v517 = vpop.xlane.xlu0 %516
          %518 = vadd.xlane.f32.xlu0 %v491
          %v519 = vpop.xlane.xlu0 %518
          %520 = vadd.xlane.f32.xlu0 %v492
          %v521 = vpop.xlane.xlu0 %520
          %522 = vadd.xlane.f32.xlu0 %v493
          %v523 = vpop.xlane.xlu0 %522
          %524 = vadd.xlane.f32.xlu0 %v494
          %v525 = vpop.xlane.xlu0 %524
          %526 = vadd.xlane.f32.xlu0 %v495
          %v527 = vpop.xlane.xlu0 %526
          %528 = vxpose.xlu0.b32.start [1/16] %v497, 128
          %529 = vxpose.xlu0.b32.cont [2/16] %v499, 128
          %530 = vxpose.xlu0.b32.cont [3/16] %v501, 128
          %531 = vxpose.xlu0.b32.cont [4/16] %v503, 128
          %532 = vxpose.xlu0.b32.cont [5/16] %v505, 128
          %533 = vxpose.xlu0.b32.cont [6/16] %v507, 128
          %534 = vxpose.xlu0.b32.cont [7/16] %v509, 128
          %535 = vxpose.xlu0.b32.cont [8/16] %v511, 128
          %536 = vxpose.xlu0.b32.cont [9/16] %v513, 128
          %537 = vxpose.xlu0.b32.cont [10/16] %v515, 128
          %538 = vxpose.xlu0.b32.cont [11/16] %v517, 128
          %539 = vxpose.xlu0.b32.cont [12/16] %v519, 128
          %540 = vxpose.xlu0.b32.cont [13/16] %v521, 128
          %541 = vxpose.xlu0.b32.cont [14/16] %v523, 128
          %542 = vxpose.xlu0.b32.cont [15/16] %v525, 128
          %543 = vxpose.xlu0.b32.end [16/16] %v527, 128
          %v544 = vpop.trf.xlu0
          %v545 = vpop.trf.xlu0
          %v546 = vpop.trf.xlu0
          %v547 = vpop.trf.xlu0
          %v548 = vpop.trf.xlu0
          %v549 = vpop.trf.xlu0
          %v550 = vpop.trf.xlu0
          %v551 = vpop.trf.xlu0
          %v552 = vpop.trf.xlu0
          %v553 = vpop.trf.xlu0
          %v554 = vpop.trf.xlu0
          %v555 = vpop.trf.xlu0
          %v556 = vpop.trf.xlu0
          %v557 = vpop.trf.xlu0
          %v558 = vpop.trf.xlu0
          %v559 = vpop.trf.xlu0
          %560 = vst [vmem:[#allocation5] sm:$0x1] %v544
          %561 = vst [vmem:[#allocation3] sm:$0x1] 0.0
          %562 = vst [vmem:[#allocation2] sm:$0xff] 0.0
          %563 = vst [vmem:[#allocation2 + $0x8] sm:$0xff] 0.0
          %564 = vst [vmem:[#allocation2 + $0x10] sm:$0xff] 0.0
          %565 = vst [vmem:[#allocation2 + $0x18] sm:$0xff] 0.0
          %566 = vst [vmem:[#allocation2 + $0x20] sm:$0xff] 0.0
          %567 = vst [vmem:[#allocation2 + $0x28] sm:$0xff] 0.0
          %568 = vst [vmem:[#allocation2 + $0x30] sm:$0xff] 0.0
          %569 = vst [vmem:[#allocation2 + $0x38] sm:$0xff] 0.0
          %570 = vst [vmem:[#allocation2 + $0x40] sm:$0xff] 0.0
          %571 = vst [vmem:[#allocation2 + $0x48] sm:$0xff] 0.0
          %572 = vst [vmem:[#allocation2 + $0x50] sm:$0xff] 0.0
          %573 = vst [vmem:[#allocation2 + $0x58] sm:$0xff] 0.0
          %574 = vst [vmem:[#allocation2 + $0x60] sm:$0xff] 0.0
          %575 = vst [vmem:[#allocation2 + $0x68] sm:$0xff] 0.0
          %576 = vst [vmem:[#allocation2 + $0x70] sm:$0xff] 0.0
          %577 = vst [vmem:[#allocation2 + $0x78] sm:$0xff] 0.0
          %vm578 = vcmask 0
          %579 = vst.msk [vmem:[#allocation4] sm:$0x1] %vm578, 0.0
        $region131: #{_multi_vq_forward.1} parent=61 // pred_fallthru
          _
        %v580 = vld [vmem:[%s316] sm:$0xff]
        %v581 = vld [vmem:[%s316 + $0x8] sm:$0xff]
        %v582 = vld [vmem:[%s316 + $0x10] sm:$0xff]
        %v583 = vld [vmem:[%s316 + $0x18] sm:$0xff]
        %v584 = vlaneseq
        %v585 = vshrl.u32 %v584, 7
        %v586 = vadd.s32 %v585, 8
        %v587 = vadd.s32 %v585, 16
        %v588 = vadd.s32 %v585, 24
        %s589 = smul.u32 %s31, 32
        %v590 = vstv %s589
        %v591 = vadd.s32 %v585, %v590
        %v592 = vadd.s32 %v586, %v590
        %v593 = vadd.s32 %v587, %v590
        %v594 = vadd.s32 %v588, %v590
        %vm595 = vcmp.lt.s32.totalorder %v591, 26
        %vm596 = vcmp.lt.s32.totalorder %v592, 26
        %vm597 = vcmp.lt.s32.totalorder %v593, 26
        %vm598 = vcmp.lt.s32.totalorder %v594, 26
        %v599 = vsel %vm595, 1, 0
        %v600 = vsel %vm596, 1, 0
        %v601 = vsel %vm597, 1, 0
        %v602 = vsel %vm598, 1, 0
        %vm603 = vcmp.eq.s32.totalorder %v599, 1
        %vm604 = vcmp.eq.s32.totalorder %v600, 1
        %vm605 = vcmp.eq.s32.totalorder %v601, 1
        %vm606 = vcmp.eq.s32.totalorder %v602, 1
        %v607 = vsel %vm603, %v580, 0.0
        %v608 = vsel %vm604, %v581, 0.0
        %v609 = vsel %vm605, %v582, 0.0
        %v610 = vsel %vm606, %v583, 0.0
        %v611 = vld [vmem:[#allocation12] sm:$0xff]
        %v612 = vld [vmem:[#allocation12 + $0x8] sm:$0xff]
        %v613 = vld [vmem:[#allocation12 + $0x10] sm:$0xff]
        %v614 = vld [vmem:[#allocation12 + $0x18] sm:$0xff]
        %v615 = vld [vmem:[#allocation12 + $0x20] sm:$0xff]
        %v616 = vld [vmem:[#allocation12 + $0x28] sm:$0xff]
        %v617 = vld [vmem:[#allocation12 + $0x30] sm:$0xff]
        %v618 = vld [vmem:[#allocation12 + $0x38] sm:$0xff]
        %v619 = vld [vmem:[#allocation12 + $0x40] sm:$0xff]
        %v620 = vld [vmem:[#allocation12 + $0x48] sm:$0xff]
        %v621 = vld [vmem:[#allocation12 + $0x50] sm:$0xff]
        %v622 = vld [vmem:[#allocation12 + $0x58] sm:$0xff]
        %v623 = vld [vmem:[#allocation12 + $0x60] sm:$0xff]
        %v624 = vld [vmem:[#allocation12 + $0x68] sm:$0xff]
        %v625 = vld [vmem:[#allocation12 + $0x70] sm:$0xff]
        %v626 = vld [vmem:[#allocation12 + $0x78] sm:$0xff]
        %627 = vmatpush.xpose.msra.mxu0 %v626
        %628 = vmatpush.xpose.msra.mxu0 %v625
        %629 = vmatpush.xpose.msra.mxu0 %v624
        %630 = vmatpush.xpose.msra.mxu0 %v623
        %631 = vmatpush.xpose.msra.mxu0 %v622
        %632 = vmatpush.xpose.msra.mxu0 %v621
        %633 = vmatpush.xpose.msra.mxu0 %v620
        %634 = vmatpush.xpose.msra.mxu0 %v619
        %635 = vmatpush.xpose.msra.mxu0 %v618
        %636 = vmatpush.xpose.msra.mxu0 %v617
        %637 = vmatpush.xpose.msra.mxu0 %v616
        %638 = vmatpush.xpose.msra.mxu0 %v615
        %639 = vmatpush.xpose.msra.mxu0 %v614
        %640 = vmatpush.xpose.msra.mxu0 %v613
        %641 = vmatpush.xpose.msra.mxu0 %v612
        %642 = vmatpush.xpose.msra.mxu0 %v611
        %643 = vmatmul.f32.gmra.mxu0 %v607
        %v644 = vpop.f32.mrf.mxu0
        %v645 = vadd.f32 0.0, %v644
        %646 = vmatmul.f32.gmra.mxu0 %v608
        %v647 = vpop.f32.mrf.mxu0
        %v648 = vadd.f32 0.0, %v647
        %649 = vmatmul.f32.gmra.mxu0 %v609
        %v650 = vpop.f32.mrf.mxu0
        %v651 = vadd.f32 0.0, %v650
        %652 = vmatmul.f32.gmra.mxu0 %v610
        %v653 = vpop.f32.mrf.mxu0
        %v654 = vadd.f32 0.0, %v653
        %655 = vdwg.mxu0
        %v656 = vld [vmem:[#allocation5] sm:$0x1]
        %v657 = vmul.f32 %v645, 2.0
        %v658 = vmul.f32 %v648, 2.0
        %v659 = vmul.f32 %v651, 2.0
        %v660 = vmul.f32 %v654, 2.0
        %v662 = vperm.slane %v656, 0
        %v664 = vsub.f32 %v662, %v657
        %v665 = vsub.f32 %v662, %v658
        %v666 = vsub.f32 %v662, %v659
        %v667 = vsub.f32 %v662, %v660
        %668 = vmin.xlane.f32.xlu0 %v664
        %v669 = vpop.xlane.xlu0 %668
        %670 = vmin.xlane.f32.xlu0 %v665
        %v671 = vpop.xlane.xlu0 %670
        %672 = vmin.xlane.f32.xlu0 %v666
        %v673 = vpop.xlane.xlu0 %672
        %674 = vmin.xlane.f32.xlu0 %v667
        %v675 = vpop.xlane.xlu0 %674
        %v676 = vlaneseq
        %v677 = vand.u32 %v676, 127
        %vm678 = vcmp.eq.f32.partialorder %v664, %v669
        %vm679 = vcmp.eq.f32.partialorder %v665, %v671
        %vm680 = vcmp.eq.f32.partialorder %v666, %v673
        %vm681 = vcmp.eq.f32.partialorder %v667, %v675
        %v682 = vsel %vm678, %v677, 128
        %v683 = vsel %vm679, %v677, 128
        %v684 = vsel %vm680, %v677, 128
        %v685 = vsel %vm681, %v677, 128
        %v686 = vand.u32 %v682, 65535
        %v687 = vshra.s32 %v682, 16
        %v688 = vcvt.s32.f32 %v686
        %v689 = vcvt.s32.f32 %v687
        %690 = vmin.xlane.f32.xlu0 %v689
        %v691 = vpop.xlane.xlu0 %690
        %vm692 = vcmp.eq.f32.partialorder %v689, %v691
        %v693 = vsel %vm692, %v688, inf
        %694 = vmin.xlane.f32.xlu0 %v693
        %v695 = vpop.xlane.xlu0 %694
        %v696 = vcvt.f32.s32 %v695
        %v697 = vcvt.f32.s32 %v691
        %v698 = vshll.u32 %v697, 16
        %v699 = vadd.s32 %v698, %v696
        %v700 = vand.u32 %v683, 65535
        %v701 = vshra.s32 %v683, 16
        %v702 = vcvt.s32.f32 %v700
        %v703 = vcvt.s32.f32 %v701
        %704 = vmin.xlane.f32.xlu0 %v703
        %v705 = vpop.xlane.xlu0 %704
        %vm706 = vcmp.eq.f32.partialorder %v703, %v705
        %v707 = vsel %vm706, %v702, inf
        %708 = vmin.xlane.f32.xlu0 %v707
        %v709 = vpop.xlane.xlu0 %708
        %v710 = vcvt.f32.s32 %v709
        %v711 = vcvt.f32.s32 %v705
        %v712 = vshll.u32 %v711, 16
        %v713 = vadd.s32 %v712, %v710
        %v714 = vand.u32 %v684, 65535
        %v715 = vshra.s32 %v684, 16
        %v716 = vcvt.s32.f32 %v714
        %v717 = vcvt.s32.f32 %v715
        %718 = vmin.xlane.f32.xlu0 %v717
        %v719 = vpop.xlane.xlu0 %718
        %vm720 = vcmp.eq.f32.partialorder %v717, %v719
        %v721 = vsel %vm720, %v716, inf
        %722 = vmin.xlane.f32.xlu0 %v721
        %v723 = vpop.xlane.xlu0 %722
        %v724 = vcvt.f32.s32 %v723
        %v725 = vcvt.f32.s32 %v719
        %v726 = vshll.u32 %v725, 16
        %v727 = vadd.s32 %v726, %v724
        %v728 = vand.u32 %v685, 65535
        %v729 = vshra.s32 %v685, 16
        %v730 = vcvt.s32.f32 %v728
        %v731 = vcvt.s32.f32 %v729
        %732 = vmin.xlane.f32.xlu0 %v731
        %v733 = vpop.xlane.xlu0 %732
        %vm734 = vcmp.eq.f32.partialorder %v731, %v733
        %v735 = vsel %vm734, %v730, inf
        %736 = vmin.xlane.f32.xlu0 %v735
        %v737 = vpop.xlane.xlu0 %736
        %v738 = vcvt.f32.s32 %v737
        %v739 = vcvt.f32.s32 %v733
        %v740 = vshll.u32 %v739, 16
        %v741 = vadd.s32 %v740, %v738
        %vm742 = vcmp.eq.s32.totalorder %v677, %v699
        %vm743 = vcmp.eq.s32.totalorder %v677, %v713
        %vm744 = vcmp.eq.s32.totalorder %v677, %v727
        %vm745 = vcmp.eq.s32.totalorder %v677, %v741
        %vm746 = vmand %vm742, %vm603
        %vm747 = vmand %vm743, %vm604
        %vm748 = vmand %vm744, %vm605
        %vm749 = vmand %vm745, %vm606
        %v750 = vsel %vm746, 1, 0
        %v751 = vsel %vm747, 1, 0
        %v752 = vsel %vm748, 1, 0
        %v753 = vsel %vm749, 1, 0
        %v754 = vcvt.s32.f32 %v750
        %v755 = vcvt.s32.f32 %v751
        %v756 = vcvt.s32.f32 %v752
        %v757 = vcvt.s32.f32 %v753
        %758 = vmatpush.msra.mxu0 %v626
        %759 = vmatpush.msra.mxu0 %v625
        %760 = vmatpush.msra.mxu0 %v624
        %761 = vmatpush.msra.mxu0 %v623
        %762 = vmatpush.msra.mxu0 %v622
        %763 = vmatpush.msra.mxu0 %v621
        %764 = vmatpush.msra.mxu0 %v620
        %765 = vmatpush.msra.mxu0 %v619
        %766 = vmatpush.msra.mxu0 %v618
        %767 = vmatpush.msra.mxu0 %v617
        %768 = vmatpush.msra.mxu0 %v616
        %769 = vmatpush.msra.mxu0 %v615
        %770 = vmatpush.msra.mxu0 %v614
        %771 = vmatpush.msra.mxu0 %v613
        %772 = vmatpush.msra.mxu0 %v612
        %773 = vmatpush.msra.mxu0 %v611
        %774 = vmatmul.f32.gmra.mxu0 %v754
        %v775 = vpop.f32.mrf.mxu0
        %v776 = vadd.f32 0.0, %v775
        %777 = vmatmul.f32.gmra.mxu0 %v755
        %v778 = vpop.f32.mrf.mxu0
        %v779 = vadd.f32 0.0, %v778
        %780 = vmatmul.f32.gmra.mxu0 %v756
        %v781 = vpop.f32.mrf.mxu0
        %v782 = vadd.f32 0.0, %v781
        %783 = vmatmul.f32.gmra.mxu0 %v757
        %v784 = vpop.f32.mrf.mxu0
        %v785 = vadd.f32 0.0, %v784
        %786 = vdwg.mxu0
        %787 = vst [vmem:[%s334] sm:$0xff] %v776
        %788 = vst [vmem:[%s334 + $0x8] sm:$0xff] %v779
        %789 = vst [vmem:[%s334 + $0x10] sm:$0xff] %v782
        %790 = vst [vmem:[%s334 + $0x18] sm:$0xff] %v785
        %v791 = vld [vmem:[#allocation3] sm:$0x1]
        %v792 = vadd.f32 %v754, %v755
        %v793 = vadd.f32 %v792, %v756
        %v794 = vadd.f32 %v793, %v757
        %v795 = vrot.slane %v794, 4
        %v796 = vadd.f32 %v794, %v795
        %v797 = vrot.slane %v796, 2
        %v798 = vadd.f32 %v796, %v797
        %v799 = vrot.slane %v798, 1
        %v800 = vadd.f32 %v798, %v799
        %v801 = vadd.f32 %v791, %v800
        %802 = vst [vmem:[#allocation3] sm:$0x1] %v801
        %v803 = vld [vmem:[#allocation2] sm:$0xff]
        %v804 = vld [vmem:[#allocation2 + $0x8] sm:$0xff]
        %v805 = vld [vmem:[#allocation2 + $0x10] sm:$0xff]
        %v806 = vld [vmem:[#allocation2 + $0x18] sm:$0xff]
        %v807 = vld [vmem:[#allocation2 + $0x20] sm:$0xff]
        %v808 = vld [vmem:[#allocation2 + $0x28] sm:$0xff]
        %v809 = vld [vmem:[#allocation2 + $0x30] sm:$0xff]
        %v810 = vld [vmem:[#allocation2 + $0x38] sm:$0xff]
        %v811 = vld [vmem:[#allocation2 + $0x40] sm:$0xff]
        %v812 = vld [vmem:[#allocation2 + $0x48] sm:$0xff]
        %v813 = vld [vmem:[#allocation2 + $0x50] sm:$0xff]
        %v814 = vld [vmem:[#allocation2 + $0x58] sm:$0xff]
        %v815 = vld [vmem:[#allocation2 + $0x60] sm:$0xff]
        %v816 = vld [vmem:[#allocation2 + $0x68] sm:$0xff]
        %v817 = vld [vmem:[#allocation2 + $0x70] sm:$0xff]
        %v818 = vld [vmem:[#allocation2 + $0x78] sm:$0xff]
        %819 = vxpose.xlu0.b32.start [1/16] %v754, 128
        %820 = vxpose.xlu0.b32.cont [2/16] %v755, 128
        %821 = vxpose.xlu0.b32.cont [3/16] %v756, 128
        %822 = vxpose.xlu0.b32.cont [4/16] %v757, 128
        %823 = vxpose.xlu0.b32.cont [5/16] 0.0, 128
        %824 = vxpose.xlu0.b32.cont [6/16] 0.0, 128
        %825 = vxpose.xlu0.b32.cont [7/16] 0.0, 128
        %826 = vxpose.xlu0.b32.cont [8/16] 0.0, 128
        %827 = vxpose.xlu0.b32.cont [9/16] 0.0, 128
        %828 = vxpose.xlu0.b32.cont [10/16] 0.0, 128
        %829 = vxpose.xlu0.b32.cont [11/16] 0.0, 128
        %830 = vxpose.xlu0.b32.cont [12/16] 0.0, 128
        %831 = vxpose.xlu0.b32.cont [13/16] 0.0, 128
        %832 = vxpose.xlu0.b32.cont [14/16] 0.0, 128
        %833 = vxpose.xlu0.b32.cont [15/16] 0.0, 128
        %834 = vxpose.xlu0.b32.end [16/16] 0.0, 128
        %v835 = vpop.trf.xlu0
        %v836 = vpop.trf.xlu0
        %v837 = vpop.trf.xlu0
        %v838 = vpop.trf.xlu0
        %v839 = vpop.trf.xlu0
        %v840 = vpop.trf.xlu0
        %v841 = vpop.trf.xlu0
        %v842 = vpop.trf.xlu0
        %v843 = vpop.trf.xlu0
        %v844 = vpop.trf.xlu0
        %v845 = vpop.trf.xlu0
        %v846 = vpop.trf.xlu0
        %v847 = vpop.trf.xlu0
        %v848 = vpop.trf.xlu0
        %v849 = vpop.trf.xlu0
        %v850 = vpop.trf.xlu0
        %vm851 = vcmask 261120
        %v853 = vsel %vm851, %v835, 0
        %v856 = vsel %vm851, %v836, 0
        %v859 = vsel %vm851, %v837, 0
        %v862 = vsel %vm851, %v838, 0
        %v865 = vsel %vm851, %v839, 0
        %v868 = vsel %vm851, %v840, 0
        %v871 = vsel %vm851, %v841, 0
        %v874 = vsel %vm851, %v842, 0
        %v877 = vsel %vm851, %v843, 0
        %v880 = vsel %vm851, %v844, 0
        %v883 = vsel %vm851, %v845, 0
        %v886 = vsel %vm851, %v846, 0
        %v889 = vsel %vm851, %v847, 0
        %v892 = vsel %vm851, %v848, 0
        %v895 = vsel %vm851, %v849, 0
        %v898 = vsel %vm851, %v850, 0
        %900 = vmatpush.msra.mxu0 0.0
        %901 = vmatpush.msra.mxu0 0.0
        %902 = vmatpush.msra.mxu0 0.0
        %903 = vmatpush.msra.mxu0 0.0
        %904 = vmatpush.msra.mxu0 0.0
        %905 = vmatpush.msra.mxu0 0.0
        %906 = vmatpush.msra.mxu0 0.0
        %907 = vmatpush.msra.mxu0 0.0
        %908 = vmatpush.msra.mxu0 0.0
        %909 = vmatpush.msra.mxu0 0.0
        %910 = vmatpush.msra.mxu0 0.0
        %911 = vmatpush.msra.mxu0 0.0
        %912 = vmatpush.msra.mxu0 %v610
        %913 = vmatpush.msra.mxu0 %v609
        %914 = vmatpush.msra.mxu0 %v608
        %915 = vmatpush.msra.mxu0 %v607
        %916 = vmatmul.f32.gmra.mxu0 %v853
        %v917 = vpop.f32.mrf.mxu0
        %v918 = vadd.f32 0.0, %v917
        %919 = vmatmul.f32.gmra.mxu0 %v856
        %v920 = vpop.f32.mrf.mxu0
        %v921 = vadd.f32 0.0, %v920
        %922 = vmatmul.f32.gmra.mxu0 %v859
        %v923 = vpop.f32.mrf.mxu0
        %v924 = vadd.f32 0.0, %v923
        %925 = vmatmul.f32.gmra.mxu0 %v862
        %v926 = vpop.f32.mrf.mxu0
        %v927 = vadd.f32 0.0, %v926
        %928 = vmatmul.f32.gmra.mxu0 %v865
        %v929 = vpop.f32.mrf.mxu0
        %v930 = vadd.f32 0.0, %v929
        %931 = vmatmul.f32.gmra.mxu0 %v868
        %v932 = vpop.f32.mrf.mxu0
        %v933 = vadd.f32 0.0, %v932
        %934 = vmatmul.f32.gmra.mxu0 %v871
        %v935 = vpop.f32.mrf.mxu0
        %v936 = vadd.f32 0.0, %v935
        %937 = vmatmul.f32.gmra.mxu0 %v874
        %v938 = vpop.f32.mrf.mxu0
        %v939 = vadd.f32 0.0, %v938
        %940 = vmatmul.f32.gmra.mxu0 %v877
        %v941 = vpop.f32.mrf.mxu0
        %v942 = vadd.f32 0.0, %v941
        %943 = vmatmul.f32.gmra.mxu0 %v880
        %v944 = vpop.f32.mrf.mxu0
        %v945 = vadd.f32 0.0, %v944
        %946 = vmatmul.f32.gmra.mxu0 %v883
        %v947 = vpop.f32.mrf.mxu0
        %v948 = vadd.f32 0.0, %v947
        %949 = vmatmul.f32.gmra.mxu0 %v886
        %v950 = vpop.f32.mrf.mxu0
        %v951 = vadd.f32 0.0, %v950
        %952 = vmatmul.f32.gmra.mxu0 %v889
        %v953 = vpop.f32.mrf.mxu0
        %v954 = vadd.f32 0.0, %v953
        %955 = vmatmul.f32.gmra.mxu0 %v892
        %v956 = vpop.f32.mrf.mxu0
        %v957 = vadd.f32 0.0, %v956
        %958 = vmatmul.f32.gmra.mxu0 %v895
        %v959 = vpop.f32.mrf.mxu0
        %v960 = vadd.f32 0.0, %v959
        %961 = vmatmul.f32.gmra.mxu0 %v898
        %v962 = vpop.f32.mrf.mxu0
        %v963 = vadd.f32 0.0, %v962
        %964 = vdwg.mxu0
        %v965 = vadd.f32 %v803, %v918
        %v966 = vadd.f32 %v804, %v921
        %v967 = vadd.f32 %v805, %v924
        %v968 = vadd.f32 %v806, %v927
        %v969 = vadd.f32 %v807, %v930
        %v970 = vadd.f32 %v808, %v933
        %v971 = vadd.f32 %v809, %v936
        %v972 = vadd.f32 %v810, %v939
        %v973 = vadd.f32 %v811, %v942
        %v974 = vadd.f32 %v812, %v945
        %v975 = vadd.f32 %v813, %v948
        %v976 = vadd.f32 %v814, %v951
        %v977 = vadd.f32 %v815, %v954
        %v978 = vadd.f32 %v816, %v957
        %v979 = vadd.f32 %v817, %v960
        %v980 = vadd.f32 %v818, %v963
        %981 = vst [vmem:[#allocation2] sm:$0xff] %v965
        %982 = vst [vmem:[#allocation2 + $0x8] sm:$0xff] %v966
        %983 = vst [vmem:[#allocation2 + $0x10] sm:$0xff] %v967
        %984 = vst [vmem:[#allocation2 + $0x18] sm:$0xff] %v968
        %985 = vst [vmem:[#allocation2 + $0x20] sm:$0xff] %v969
        %986 = vst [vmem:[#allocation2 + $0x28] sm:$0xff] %v970
        %987 = vst [vmem:[#allocation2 + $0x30] sm:$0xff] %v971
        %988 = vst [vmem:[#allocation2 + $0x38] sm:$0xff] %v972
        %989 = vst [vmem:[#allocation2 + $0x40] sm:$0xff] %v973
        %990 = vst [vmem:[#allocation2 + $0x48] sm:$0xff] %v974
        %991 = vst [vmem:[#allocation2 + $0x50] sm:$0xff] %v975
        %992 = vst [vmem:[#allocation2 + $0x58] sm:$0xff] %v976
        %993 = vst [vmem:[#allocation2 + $0x60] sm:$0xff] %v977
        %994 = vst [vmem:[#allocation2 + $0x68] sm:$0xff] %v978
        %995 = vst [vmem:[#allocation2 + $0x70] sm:$0xff] %v979
        %996 = vst [vmem:[#allocation2 + $0x78] sm:$0xff] %v980
        %v997 = vsub.f32 %v607, %v776
        %v998 = vsub.f32 %v608, %v779
        %v999 = vsub.f32 %v609, %v782
        %v1000 = vsub.f32 %v610, %v785
        %v1001 = vld [vmem:[#allocation4] sm:$0x1]
        %v1002 = vmul.f32 %v997, %v997
        %v1003 = vmul.f32 %v998, %v998
        %v1004 = vmul.f32 %v999, %v999
        %v1005 = vmul.f32 %v1000, %v1000
        %v1006 = vadd.f32 %v1002, %v1003
        %v1007 = vadd.f32 %v1006, %v1004
        %v1008 = vadd.f32 %v1007, %v1005
        %v1009 = vrot.slane %v1008, 4
        %v1010 = vadd.f32 %v1008, %v1009
        %v1011 = vrot.slane %v1010, 2
        %v1012 = vadd.f32 %v1010, %v1011
        %v1013 = vrot.slane %v1012, 1
        %v1014 = vadd.f32 %v1012, %v1013
        %1015 = vadd.xlane.f32.xlu0 %v1014
        %v1016 = vpop.xlane.xlu0 %1015
        %v1017 = vadd.f32 %v1001, %v1016
        %vm1018 = vcmask 0
        %1019 = vst.msk [vmem:[#allocation4] sm:$0x1] %vm1018, %v1017
        // Predicated region
        $region132: #{_multi_vq_forward.1} parent=61 // pred_check
          %p1020 = pneg %p348
        $region133: #{_multi_vq_forward.1} parent=61 // pred_check_branch
          %1022 = sbr.rel (%p1020) target = $region135
        $region134: #{_multi_vq_forward.1} parent=61 // pred_region
          %v1023 = vld [vmem:[#allocation13] sm:$0xff]
          %v1024 = vld [vmem:[#allocation13 + $0x8] sm:$0xff]
          %v1025 = vld [vmem:[#allocation13 + $0x10] sm:$0xff]
          %v1026 = vld [vmem:[#allocation13 + $0x18] sm:$0xff]
          %v1027 = vld [vmem:[#allocation13 + $0x20] sm:$0xff]
          %v1028 = vld [vmem:[#allocation13 + $0x28] sm:$0xff]
          %v1029 = vld [vmem:[#allocation13 + $0x30] sm:$0xff]
          %v1030 = vld [vmem:[#allocation13 + $0x38] sm:$0xff]
          %v1031 = vld [vmem:[#allocation13 + $0x40] sm:$0xff]
          %v1032 = vld [vmem:[#allocation13 + $0x48] sm:$0xff]
          %v1033 = vld [vmem:[#allocation13 + $0x50] sm:$0xff]
          %v1034 = vld [vmem:[#allocation13 + $0x58] sm:$0xff]
          %v1035 = vld [vmem:[#allocation13 + $0x60] sm:$0xff]
          %v1036 = vld [vmem:[#allocation13 + $0x68] sm:$0xff]
          %v1037 = vld [vmem:[#allocation13 + $0x70] sm:$0xff]
          %v1038 = vld [vmem:[#allocation13 + $0x78] sm:$0xff]
          %v1039 = vld [vmem:[#allocation2] sm:$0xff]
          %v1040 = vld [vmem:[#allocation2 + $0x8] sm:$0xff]
          %v1041 = vld [vmem:[#allocation2 + $0x10] sm:$0xff]
          %v1042 = vld [vmem:[#allocation2 + $0x18] sm:$0xff]
          %v1043 = vld [vmem:[#allocation2 + $0x20] sm:$0xff]
          %v1044 = vld [vmem:[#allocation2 + $0x28] sm:$0xff]
          %v1045 = vld [vmem:[#allocation2 + $0x30] sm:$0xff]
          %v1046 = vld [vmem:[#allocation2 + $0x38] sm:$0xff]
          %v1047 = vld [vmem:[#allocation2 + $0x40] sm:$0xff]
          %v1048 = vld [vmem:[#allocation2 + $0x48] sm:$0xff]
          %v1049 = vld [vmem:[#allocation2 + $0x50] sm:$0xff]
          %v1050 = vld [vmem:[#allocation2 + $0x58] sm:$0xff]
          %v1051 = vld [vmem:[#allocation2 + $0x60] sm:$0xff]
          %v1052 = vld [vmem:[#allocation2 + $0x68] sm:$0xff]
          %v1053 = vld [vmem:[#allocation2 + $0x70] sm:$0xff]
          %v1054 = vld [vmem:[#allocation2 + $0x78] sm:$0xff]
          %v1055 = vsub.f32 %v1023, %v1039
          %v1056 = vsub.f32 %v1024, %v1040
          %v1057 = vsub.f32 %v1025, %v1041
          %v1058 = vsub.f32 %v1026, %v1042
          %v1059 = vsub.f32 %v1027, %v1043
          %v1060 = vsub.f32 %v1028, %v1044
          %v1061 = vsub.f32 %v1029, %v1045
          %v1062 = vsub.f32 %v1030, %v1046
          %v1063 = vsub.f32 %v1031, %v1047
          %v1064 = vsub.f32 %v1032, %v1048
          %v1065 = vsub.f32 %v1033, %v1049
          %v1066 = vsub.f32 %v1034, %v1050
          %v1067 = vsub.f32 %v1035, %v1051
          %v1068 = vsub.f32 %v1036, %v1052
          %v1069 = vsub.f32 %v1037, %v1053
          %v1070 = vsub.f32 %v1038, %v1054
          %v1071 = vmul.f32 %v1055, 0.01
          %v1072 = vmul.f32 %v1056, 0.01
          %v1073 = vmul.f32 %v1057, 0.01
          %v1074 = vmul.f32 %v1058, 0.01
          %v1075 = vmul.f32 %v1059, 0.01
          %v1076 = vmul.f32 %v1060, 0.01
          %v1077 = vmul.f32 %v1061, 0.01
          %v1078 = vmul.f32 %v1062, 0.01
          %v1079 = vmul.f32 %v1063, 0.01
          %v1080 = vmul.f32 %v1064, 0.01
          %v1081 = vmul.f32 %v1065, 0.01
          %v1082 = vmul.f32 %v1066, 0.01
          %v1083 = vmul.f32 %v1067, 0.01
          %v1084 = vmul.f32 %v1068, 0.01
          %v1085 = vmul.f32 %v1069, 0.01
          %v1086 = vmul.f32 %v1070, 0.01
          %v1087 = vsub.f32 %v1023, %v1071
          %v1088 = vsub.f32 %v1024, %v1072
          %v1089 = vsub.f32 %v1025, %v1073
          %v1090 = vsub.f32 %v1026, %v1074
          %v1091 = vsub.f32 %v1027, %v1075
          %v1092 = vsub.f32 %v1028, %v1076
          %v1093 = vsub.f32 %v1029, %v1077
          %v1094 = vsub.f32 %v1030, %v1078
          %v1095 = vsub.f32 %v1031, %v1079
          %v1096 = vsub.f32 %v1032, %v1080
          %v1097 = vsub.f32 %v1033, %v1081
          %v1098 = vsub.f32 %v1034, %v1082
          %v1099 = vsub.f32 %v1035, %v1083
          %v1100 = vsub.f32 %v1036, %v1084
          %v1101 = vsub.f32 %v1037, %v1085
          %v1102 = vsub.f32 %v1038, %v1086
          %1103 = vst [vmem:[#allocation13] sm:$0xff] %v1087
          %1104 = vst [vmem:[#allocation13 + $0x8] sm:$0xff] %v1088
          %1105 = vst [vmem:[#allocation13 + $0x10] sm:$0xff] %v1089
          %1106 = vst [vmem:[#allocation13 + $0x18] sm:$0xff] %v1090
          %1107 = vst [vmem:[#allocation13 + $0x20] sm:$0xff] %v1091
          %1108 = vst [vmem:[#allocation13 + $0x28] sm:$0xff] %v1092
          %1109 = vst [vmem:[#allocation13 + $0x30] sm:$0xff] %v1093
          %1110 = vst [vmem:[#allocation13 + $0x38] sm:$0xff] %v1094
          %1111 = vst [vmem:[#allocation13 + $0x40] sm:$0xff] %v1095
          %1112 = vst [vmem:[#allocation13 + $0x48] sm:$0xff] %v1096
          %1113 = vst [vmem:[#allocation13 + $0x50] sm:$0xff] %v1097
          %1114 = vst [vmem:[#allocation13 + $0x58] sm:$0xff] %v1098
          %1115 = vst [vmem:[#allocation13 + $0x60] sm:$0xff] %v1099
          %1116 = vst [vmem:[#allocation13 + $0x68] sm:$0xff] %v1100
          %1117 = vst [vmem:[#allocation13 + $0x70] sm:$0xff] %v1101
          %1118 = vst [vmem:[#allocation13 + $0x78] sm:$0xff] %v1102
          %v1119 = vld [vmem:[#allocation15] sm:$0x1]
          %v1120 = vld [vmem:[#allocation3] sm:$0x1]
          %v1121 = vsub.f32 %v1119, %v1120
          %v1122 = vmul.f32 %v1121, 0.01
          %v1123 = vsub.f32 %v1119, %v1122
          %1124 = vst [vmem:[#allocation15] sm:$0x1] %v1123
          %s1125 = sld [smem:[#allocation7 + %s30]]
          %v1126 = vstv %s1125
          %v1127 = vrcp.pop %v1126
          %v1128 = vmul.f32 %v1126, %v1127
          %v1129 = vsub.f32 1.0, %v1128
          %v1130 = vmul.f32 %v1127, %v1129
          %v1131 = vadd.f32 %v1127, %v1130
          %vm1132 = vweird.f32 %v1126
          %vm1133 = vweird.f32 %v1127
          %vm1134 = vmor %vm1132, %vm1133
          %v1135 = vsel %vm1134, %v1127, %v1131
          %v1136 = vand.u32 2147483647, %v1126
          %vm1137 = vcmp.eq.f32.partialorder %v1136, 8.507059e+37
          %v1138 = vand.u32 %v1126, 2147483648
          %v1139 = vor.u32 1.1754944e-38, %v1138
          %v1140 = vsel %vm1137, %v1139, %v1135
          %s1141 = vtos %v1140
          %v1142 = vld [vmem:[#allocation15] sm:$0x1]
          %v1143 = vstv %s1141
          %v1144 = vmul.f32 %v1142, %v1143
          %vm1145 = vcmask 1040384
          %v1146 = vsel %vm1145, %v1144, 0.0
          %1147 = vadd.xlane.f32.xlu0 %v1146
          %v1148 = vpop.xlane.xlu0 %1147
          %v1149 = vadd.f32 %v1144, 1e-05
          %v1150 = vadd.f32 %v1148, 0.00128
          %v1151 = vrcp.pop %v1150
          %v1152 = vmul.f32 %v1150, %v1151
          %v1153 = vsub.f32 1.0, %v1152
          %v1154 = vmul.f32 %v1151, %v1153
          %v1155 = vadd.f32 %v1151, %v1154
          %vm1156 = vweird.f32 %v1150
          %vm1157 = vweird.f32 %v1151
          %vm1158 = vmor %vm1156, %vm1157
          %v1159 = vsel %vm1158, %v1151, %v1155
          %v1160 = vand.u32 2147483647, %v1150
          %vm1161 = vcmp.eq.f32.partialorder %v1160, 8.507059e+37
          %v1162 = vand.u32 %v1150, 2147483648
          %v1163 = vor.u32 1.1754944e-38, %v1162
          %v1164 = vsel %vm1161, %v1163, %v1159
          %v1165 = vmul.f32 %v1148, %v1164
          %v1166 = vmul.f32 %v1149, %v1165
          %v1167 = vrcp.pop %v1166
          %v1168 = vld [vmem:[#allocation13] sm:$0xff]
          %v1169 = vld [vmem:[#allocation13 + $0x8] sm:$0xff]
          %v1170 = vld [vmem:[#allocation13 + $0x10] sm:$0xff]
          %v1171 = vld [vmem:[#allocation13 + $0x18] sm:$0xff]
          %v1172 = vld [vmem:[#allocation13 + $0x20] sm:$0xff]
          %v1173 = vld [vmem:[#allocation13 + $0x28] sm:$0xff]
          %v1174 = vld [vmem:[#allocation13 + $0x30] sm:$0xff]
          %v1175 = vld [vmem:[#allocation13 + $0x38] sm:$0xff]
          %v1176 = vld [vmem:[#allocation13 + $0x40] sm:$0xff]
          %v1177 = vld [vmem:[#allocation13 + $0x48] sm:$0xff]
          %v1178 = vld [vmem:[#allocation13 + $0x50] sm:$0xff]
          %v1179 = vld [vmem:[#allocation13 + $0x58] sm:$0xff]
          %v1180 = vld [vmem:[#allocation13 + $0x60] sm:$0xff]
          %v1181 = vld [vmem:[#allocation13 + $0x68] sm:$0xff]
          %v1182 = vld [vmem:[#allocation13 + $0x70] sm:$0xff]
          %v1183 = vld [vmem:[#allocation13 + $0x78] sm:$0xff]
          %v1184 = vmul.f32 %v1168, %v1143
          %v1185 = vmul.f32 %v1169, %v1143
          %v1186 = vmul.f32 %v1170, %v1143
          %v1187 = vmul.f32 %v1171, %v1143
          %v1188 = vmul.f32 %v1172, %v1143
          %v1189 = vmul.f32 %v1173, %v1143
          %v1190 = vmul.f32 %v1174, %v1143
          %v1191 = vmul.f32 %v1175, %v1143
          %v1192 = vmul.f32 %v1176, %v1143
          %v1193 = vmul.f32 %v1177, %v1143
          %v1194 = vmul.f32 %v1178, %v1143
          %v1195 = vmul.f32 %v1179, %v1143
          %v1196 = vmul.f32 %v1180, %v1143
          %v1197 = vmul.f32 %v1181, %v1143
          %v1198 = vmul.f32 %v1182, %v1143
          %v1199 = vmul.f32 %v1183, %v1143
          %1200 = vxpose.xlu0.b32.start [1/16] %v1167, 128
          %1201 = vxpose.xlu0.b32.cont [2/16] 0.0, 128
          %1202 = vxpose.xlu0.b32.cont [3/16] 0.0, 128
          %1203 = vxpose.xlu0.b32.cont [4/16] 0.0, 128
          %1204 = vxpose.xlu0.b32.cont [5/16] 0.0, 128
          %1205 = vxpose.xlu0.b32.cont [6/16] 0.0, 128
          %1206 = vxpose.xlu0.b32.cont [7/16] 0.0, 128
          %1207 = vxpose.xlu0.b32.cont [8/16] 0.0, 128
          %1208 = vxpose.xlu0.b32.cont [9/16] 0.0, 128
          %1209 = vxpose.xlu0.b32.cont [10/16] 0.0, 128
          %1210 = vxpose.xlu0.b32.cont [11/16] 0.0, 128
          %1211 = vxpose.xlu0.b32.cont [12/16] 0.0, 128
          %1212 = vxpose.xlu0.b32.cont [13/16] 0.0, 128
          %1213 = vxpose.xlu0.b32.cont [14/16] 0.0, 128
          %1214 = vxpose.xlu0.b32.cont [15/16] 0.0, 128
          %1215 = vxpose.xlu0.b32.end [16/16] 0.0, 128
          %v1216 = vpop.trf.xlu0
          %v1217 = vpop.trf.xlu0
          %v1218 = vpop.trf.xlu0
          %v1219 = vpop.trf.xlu0
          %v1220 = vpop.trf.xlu0
          %v1221 = vpop.trf.xlu0
          %v1222 = vpop.trf.xlu0
          %v1223 = vpop.trf.xlu0
          %v1224 = vpop.trf.xlu0
          %v1225 = vpop.trf.xlu0
          %v1226 = vpop.trf.xlu0
          %v1227 = vpop.trf.xlu0
          %v1228 = vpop.trf.xlu0
          %v1229 = vpop.trf.xlu0
          %v1230 = vpop.trf.xlu0
          %v1231 = vpop.trf.xlu0
          %1233 = vset.pattern.permute.xlu0 0
          %1234 = vperm.xlu0 %1233, %v1216
          %v1235 = vpop.permute.xlu0 %1234
          %1238 = vset.pattern.permute.xlu0 0
          %1239 = vperm.xlu0 %1238, %v1217
          %v1240 = vpop.permute.xlu0 %1239
          %1243 = vset.pattern.permute.xlu0 0
          %1244 = vperm.xlu0 %1243, %v1218
          %v1245 = vpop.permute.xlu0 %1244
          %1248 = vset.pattern.permute.xlu0 0
          %1249 = vperm.xlu0 %1248, %v1219
          %v1250 = vpop.permute.xlu0 %1249
          %1253 = vset.pattern.permute.xlu0 0
          %1254 = vperm.xlu0 %1253, %v1220
          %v1255 = vpop.permute.xlu0 %1254
          %1258 = vset.pattern.permute.xlu0 0
          %1259 = vperm.xlu0 %1258, %v1221
          %v1260 = vpop.permute.xlu0 %1259
          %1263 = vset.pattern.permute.xlu0 0
          %1264 = vperm.xlu0 %1263, %v1222
          %v1265 = vpop.permute.xlu0 %1264
          %1268 = vset.pattern.permute.xlu0 0
          %1269 = vperm.xlu0 %1268, %v1223
          %v1270 = vpop.permute.xlu0 %1269
          %1273 = vset.pattern.permute.xlu0 0
          %1274 = vperm.xlu0 %1273, %v1224
          %v1275 = vpop.permute.xlu0 %1274
          %1278 = vset.pattern.permute.xlu0 0
          %1279 = vperm.xlu0 %1278, %v1225
          %v1280 = vpop.permute.xlu0 %1279
          %1283 = vset.pattern.permute.xlu0 0
          %1284 = vperm.xlu0 %1283, %v1226
          %v1285 = vpop.permute.xlu0 %1284
          %1288 = vset.pattern.permute.xlu0 0
          %1289 = vperm.xlu0 %1288, %v1227
          %v1290 = vpop.permute.xlu0 %1289
          %1293 = vset.pattern.permute.xlu0 0
          %1294 = vperm.xlu0 %1293, %v1228
          %v1295 = vpop.permute.xlu0 %1294
          %1298 = vset.pattern.permute.xlu0 0
          %1299 = vperm.xlu0 %1298, %v1229
          %v1300 = vpop.permute.xlu0 %1299
          %1303 = vset.pattern.permute.xlu0 0
          %1304 = vperm.xlu0 %1303, %v1230
          %v1305 = vpop.permute.xlu0 %1304
          %1308 = vset.pattern.permute.xlu0 0
          %1309 = vperm.xlu0 %1308, %v1231
          %v1310 = vpop.permute.xlu0 %1309
          %v1312 = vmul.f32 %v1184, %v1235
          %v1313 = vmul.f32 %v1185, %v1240
          %v1314 = vmul.f32 %v1186, %v1245
          %v1315 = vmul.f32 %v1187, %v1250
          %v1316 = vmul.f32 %v1188, %v1255
          %v1317 = vmul.f32 %v1189, %v1260
          %v1318 = vmul.f32 %v1190, %v1265
          %v1319 = vmul.f32 %v1191, %v1270
          %v1320 = vmul.f32 %v1192, %v1275
          %v1321 = vmul.f32 %v1193, %v1280
          %v1322 = vmul.f32 %v1194, %v1285
          %v1323 = vmul.f32 %v1195, %v1290
          %v1324 = vmul.f32 %v1196, %v1295
          %v1325 = vmul.f32 %v1197, %v1300
          %v1326 = vmul.f32 %v1198, %v1305
          %v1327 = vmul.f32 %v1199, %v1310
          %1328 = vst [vmem:[#allocation12] sm:$0xff] %v1312
          %1329 = vst [vmem:[#allocation12 + $0x8] sm:$0xff] %v1313
          %1330 = vst [vmem:[#allocation12 + $0x10] sm:$0xff] %v1314
          %1331 = vst [vmem:[#allocation12 + $0x18] sm:$0xff] %v1315
          %1332 = vst [vmem:[#allocation12 + $0x20] sm:$0xff] %v1316
          %1333 = vst [vmem:[#allocation12 + $0x28] sm:$0xff] %v1317
          %1334 = vst [vmem:[#allocation12 + $0x30] sm:$0xff] %v1318
          %1335 = vst [vmem:[#allocation12 + $0x38] sm:$0xff] %v1319
          %1336 = vst [vmem:[#allocation12 + $0x40] sm:$0xff] %v1320
          %1337 = vst [vmem:[#allocation12 + $0x48] sm:$0xff] %v1321
          %1338 = vst [vmem:[#allocation12 + $0x50] sm:$0xff] %v1322
          %1339 = vst [vmem:[#allocation12 + $0x58] sm:$0xff] %v1323
          %1340 = vst [vmem:[#allocation12 + $0x60] sm:$0xff] %v1324
          %1341 = vst [vmem:[#allocation12 + $0x68] sm:$0xff] %v1325
          %1342 = vst [vmem:[#allocation12 + $0x70] sm:$0xff] %v1326
          %1343 = vst [vmem:[#allocation12 + $0x78] sm:$0xff] %v1327
          %v1344 = vld [vmem:[#allocation16] sm:$0x1]
          %v1345 = vld [vmem:[#allocation4] sm:$0x1]
          %v1346 = vmul.f32 %v1345, 7.5120195e-05
          %v1347 = vadd.f32 %v1344, %v1346
          %1348 = vst.msk [vmem:[#allocation16] sm:$0x1] %vm1018, %v1347
          %v1349 = vld [vmem:[#allocation3] sm:$0x1]
          %v1350 = vmul.f32 %v1349, 0.03846154
          %v1351 = vadd.f32 %v1350, 1e-06
          %v1352 = vlog2.pop %v1351
          %v1353 = vmul.f32 %v1352, 0.6931472
          %v1354 = vmul.f32 %v1350, %v1353
          %v1355 = vsel %vm1145, %v1354, 0.0
          %1356 = vadd.xlane.f32.xlu0 %v1355
          %v1357 = vpop.xlane.xlu0 %1356
          %v1358 = vld [vmem:[#allocation18] sm:$0x1]
          %v1359 = vsub.f32 0.0, %v1357
          %v1360 = vmul.f32 %v1359, 1.442695
          %v1361 = vpow.pop %v1360
          %v1362 = vadd.f32 %v1358, %v1361
          %1363 = vst.msk [vmem:[#allocation18] sm:$0x1] %vm1018, %v1362
        $region135: #{_multi_vq_forward.1} parent=61 // pred_fallthru
          _
        %s1364 = sand.u32 %s97, 1
        %s1365 = sand.u32 %s97, 1
        %s1366 = smul.addr %s1365, 32
        %s1367 = scalar_lea.vmem [#allocation11], %s1366
        // Predicated region
        $region136: #{_multi_vq_forward.1} parent=61 // pred_check
          %p1368 = pneg %p107
        $region137: #{_multi_vq_forward.1} parent=61 // pred_check_branch
          %1370 = sbr.rel (%p1368) target = $region139
        $region138: #{_multi_vq_forward.1} parent=61 // pred_region
          %s1371 = smul.u32 4, %s31
          %s1372 = smul.addr %s1371, 2
          %s1373 = sadd.s32 %s30, %s1372
          %s1374 = smul.addr %s1373, 8
          %s1375 = scalar_lea.vmem %s5, %s1374
          // Predicated region
          $region140: #{_multi_vq_forward.1} parent=138 // pred_check
            _
          $region141: #{_multi_vq_forward.1} parent=138 // pred_check_branch
            %1377 = sbr.rel (0) target = $region143
          $region142: #{_multi_vq_forward.1} parent=138 // pred_region
            // Predicated region
            $region144: #{_multi_vq_forward.1} parent=142 // pred_check
              _
            $region145: #{_multi_vq_forward.1} parent=142 // pred_check_branch
              %1379 = sbr.rel (0) target = $region147
            $region146: #{_multi_vq_forward.1} parent=142 // pred_region
              // Predicated region
              $region159: #{_multi_vq_forward.1} parent=146 // pred_check
                _
              $region160: #{_multi_vq_forward.1} parent=146 // pred_check_branch
                %1401 = sbr.rel (0) target = $region162
              $region161: #{_multi_vq_forward.1} parent=146 // pred_region
                loop: start=0, step=1, limit=1
                $region163: #{_multi_vq_forward.1} parent=161 // loop_pre_header
                  _
                $region164: #{_multi_vq_forward.1} parent=161 // loop_header
                  %s1403 = sphi 0, %s1407
                  %p1404 = scmp.ge.s32.totalorder %s1403, 1
                  %s1408 = sphi %s1367, %s1367
                  %s1409 = sphi %s1375, %s1375
                $region165: #{_multi_vq_forward.1} parent=161 // loop_header_branch
                  %1406 = sbr.rel (%p1404) target = $region169
                $region166: #{_multi_vq_forward.1} parent=161 // loop_body
                  %v1410 = vld [vmem:[%s1408] sm:$0xff]
                  %1411 = vst [vmem:[%s1409] sm:$0xff] %v1410
                  %v1412 = vld [vmem:[%s1408 + $0x8] sm:$0xff]
                  %1413 = vst [vmem:[%s1409 + $0x10] sm:$0xff] %v1412
                  %v1414 = vld [vmem:[%s1408 + $0x10] sm:$0xff]
                  %1415 = vst [vmem:[%s1409 + $0x20] sm:$0xff] %v1414
                  %v1416 = vld [vmem:[%s1408 + $0x18] sm:$0xff]
                  %1417 = vst [vmem:[%s1409 + $0x30] sm:$0xff] %v1416
                $region167: #{_multi_vq_forward.1} parent=161 // loop_footer
                  %s1407 = sadd.s32 1, %s1403
                $region168: #{_multi_vq_forward.1} parent=161 // loop_footer_branch
                  %1402 = sbr.rel target = $region164
                $region169: #{_multi_vq_forward.1} parent=161 // loop_exit
                  _
              $region162: #{_multi_vq_forward.1} parent=146 // pred_fallthru
                _
              // Predicated region
              $region170: #{_multi_vq_forward.1} parent=146 // pred_check
                _
              $region171: #{_multi_vq_forward.1} parent=146 // pred_check_branch
                %1419 = sbr.rel target = $region173
              $region172: #{_multi_vq_forward.1} parent=146 // pred_region
                _
              $region173: #{_multi_vq_forward.1} parent=146 // pred_fallthru
                _
            $region147: #{_multi_vq_forward.1} parent=142 // pred_fallthru
              _
            // Predicated region
            $region148: #{_multi_vq_forward.1} parent=142 // pred_check
              _
            $region149: #{_multi_vq_forward.1} parent=142 // pred_check_branch
              %1381 = sbr.rel target = $region151
            $region150: #{_multi_vq_forward.1} parent=142 // pred_region
              %s1383 = ssub.s32 256, 1
              loop: start=0, step=1, limit=1
              $region152: #{_multi_vq_forward.1} parent=150 // loop_pre_header
                _
              $region153: #{_multi_vq_forward.1} parent=150 // loop_header
                %s1385 = sphi 0, %s1389
                %p1386 = scmp.ge.s32.totalorder %s1385, 1
                %s1390 = sphi %s1367, %s1367
                %s1391 = sphi %s1375, %s1375
              $region154: #{_multi_vq_forward.1} parent=150 // loop_header_branch
                %1388 = sbr.rel (%p1386) target = $region158
              $region155: #{_multi_vq_forward.1} parent=150 // loop_body
                %v1392 = vld [vmem:[%s1390] sm:%s1383]
                %1393 = vst [vmem:[%s1391] sm:%s1383] %v1392
                %v1394 = vld [vmem:[%s1390 + $0x8] sm:%s1383]
                %1395 = vst [vmem:[%s1391 + $0x10] sm:%s1383] %v1394
                %v1396 = vld [vmem:[%s1390 + $0x10] sm:%s1383]
                %1397 = vst [vmem:[%s1391 + $0x20] sm:%s1383] %v1396
                %v1398 = vld [vmem:[%s1390 + $0x18] sm:%s1383]
                %1399 = vst [vmem:[%s1391 + $0x30] sm:%s1383] %v1398
              $region156: #{_multi_vq_forward.1} parent=150 // loop_footer
                %s1389 = sadd.s32 1, %s1385
              $region157: #{_multi_vq_forward.1} parent=150 // loop_footer_branch
                %1384 = sbr.rel target = $region153
              $region158: #{_multi_vq_forward.1} parent=150 // loop_exit
                _
            $region151: #{_multi_vq_forward.1} parent=142 // pred_fallthru
              _
          $region143: #{_multi_vq_forward.1} parent=138 // pred_fallthru
            _
          %1420 = vnop
        $region139: #{_multi_vq_forward.1} parent=61 // pred_fallthru
          _
        // Predicated region
        $region174: #{_multi_vq_forward.1} parent=61 // pred_check
          %p1421 = pneg %p128
        $region175: #{_multi_vq_forward.1} parent=61 // pred_check_branch
          %1423 = sbr.rel (%p1421) target = $region177
        $region176: #{_multi_vq_forward.1} parent=61 // pred_region
          %1425 = vsyncadd [#allocation8], 0
          %s1426 = sshll.u32 [#allocation12], 4
          %s1427 = int_to_ptr.vmem [resolvable:$true] %s1426
          %s1428 = sshll.u32 %s6, 4
          %s1429 = int_to_ptr.hbm [resolvable:$true] %s1428
          %1434 = dma.vmem_to_hbm [thread:$0]  %s1427, 2048, %s1429, [#allocation8], 128, 128, 8
        $region177: #{_multi_vq_forward.1} parent=61 // pred_fallthru
          _
        // Predicated region
        $region178: #{_multi_vq_forward.1} parent=61 // pred_check
          %p1435 = pneg %p149
        $region179: #{_multi_vq_forward.1} parent=61 // pred_check_branch
          %1437 = sbr.rel (%p1435) target = $region181
        $region180: #{_multi_vq_forward.1} parent=61 // pred_region
          %1439 = vsyncadd [#allocation14], 0
          %s1440 = sshll.u32 [#allocation13], 4
          %s1441 = int_to_ptr.vmem [resolvable:$true] %s1440
          %s1442 = sshll.u32 %s7, 4
          %s1443 = int_to_ptr.hbm [resolvable:$true] %s1442
          %1448 = dma.vmem_to_hbm [thread:$0]  %s1441, 2048, %s1443, [#allocation14], 128, 128, 8
        $region181: #{_multi_vq_forward.1} parent=61 // pred_fallthru
          _
        // Predicated region
        $region182: #{_multi_vq_forward.1} parent=61 // pred_check
          %p1449 = pneg %p170
        $region183: #{_multi_vq_forward.1} parent=61 // pred_check_branch
          %1451 = sbr.rel (%p1449) target = $region185
        $region184: #{_multi_vq_forward.1} parent=61 // pred_region
          %1453 = vsyncadd [#allocation14], 0
          %s1455 = sshll.u32 [#allocation15], 4
          %s1456 = int_to_ptr.vmem [resolvable:$true] %s1455
          %s1457 = sshll.u32 %s8, 4
          %s1458 = int_to_ptr.hbm [resolvable:$true] %s1457
          %1460 = dma.vmem_to_hbm [thread:$0]  %s1456, 16, %s1458, [#allocation14]
        $region185: #{_multi_vq_forward.1} parent=61 // pred_fallthru
          _
        // Predicated region
        $region186: #{_multi_vq_forward.1} parent=61 // pred_check
          %p1461 = pneg %p191
        $region187: #{_multi_vq_forward.1} parent=61 // pred_check_branch
          %1463 = sbr.rel (%p1461) target = $region189
        $region188: #{_multi_vq_forward.1} parent=61 // pred_region
          %1465 = vsyncadd [#allocation17], 0
          %s1467 = sshll.u32 [#allocation16], 4
          %s1468 = int_to_ptr.vmem [resolvable:$true] %s1467
          %s1469 = sshll.u32 %s9, 4
          %s1470 = int_to_ptr.hbm [resolvable:$true] %s1469
          %1472 = dma.vmem_to_hbm [thread:$0]  %s1468, 16, %s1470, [#allocation17]
        $region189: #{_multi_vq_forward.1} parent=61 // pred_fallthru
          _
        // Predicated region
        $region190: #{_multi_vq_forward.1} parent=61 // pred_check
          %p1473 = pneg %p212
        $region191: #{_multi_vq_forward.1} parent=61 // pred_check_branch
          %1475 = sbr.rel (%p1473) target = $region193
        $region192: #{_multi_vq_forward.1} parent=61 // pred_region
          %1477 = vsyncadd [#allocation17], 0
          %s1479 = sshll.u32 [#allocation18], 4
          %s1480 = int_to_ptr.vmem [resolvable:$true] %s1479
          %s1481 = sshll.u32 %s10, 4
          %s1482 = int_to_ptr.hbm [resolvable:$true] %s1481
          %1484 = dma.vmem_to_hbm [thread:$0]  %s1480, 16, %s1482, [#allocation17]
        $region193: #{_multi_vq_forward.1} parent=61 // pred_fallthru
          _
        // Predicated region
        $region194: #{_multi_vq_forward.1} parent=61 // pred_check
          %p1485 = pneg %p128
        $region195: #{_multi_vq_forward.1} parent=61 // pred_check_branch
          %1487 = sbr.rel (%p1485) target = $region197
        $region196: #{_multi_vq_forward.1} parent=61 // pred_region
          %1489 = dma.done [#allocation8], 2048
        $region197: #{_multi_vq_forward.1} parent=61 // pred_fallthru
          _
        // Predicated region
        $region198: #{_multi_vq_forward.1} parent=61 // pred_check
          %p1490 = pneg %p149
        $region199: #{_multi_vq_forward.1} parent=61 // pred_check_branch
          %1492 = sbr.rel (%p1490) target = $region201
        $region200: #{_multi_vq_forward.1} parent=61 // pred_region
          %1494 = dma.done [#allocation14], 2048
        $region201: #{_multi_vq_forward.1} parent=61 // pred_fallthru
          _
        // Predicated region
        $region202: #{_multi_vq_forward.1} parent=61 // pred_check
          %p1495 = pneg %p170
        $region203: #{_multi_vq_forward.1} parent=61 // pred_check_branch
          %1497 = sbr.rel (%p1495) target = $region205
        $region204: #{_multi_vq_forward.1} parent=61 // pred_region
          %1499 = dma.done [#allocation14], 16
        $region205: #{_multi_vq_forward.1} parent=61 // pred_fallthru
          _
        // Predicated region
        $region206: #{_multi_vq_forward.1} parent=61 // pred_check
          %p1500 = pneg %p191
        $region207: #{_multi_vq_forward.1} parent=61 // pred_check_branch
          %1502 = sbr.rel (%p1500) target = $region209
        $region208: #{_multi_vq_forward.1} parent=61 // pred_region
          %1504 = dma.done [#allocation17], 16
        $region209: #{_multi_vq_forward.1} parent=61 // pred_fallthru
          _
        // Predicated region
        $region210: #{_multi_vq_forward.1} parent=61 // pred_check
          %p1505 = pneg %p212
        $region211: #{_multi_vq_forward.1} parent=61 // pred_check_branch
          %1507 = sbr.rel (%p1505) target = $region213
        $region212: #{_multi_vq_forward.1} parent=61 // pred_region
          %1509 = dma.done [#allocation17], 16
        $region213: #{_multi_vq_forward.1} parent=61 // pred_fallthru
          _
      $region62: #{_multi_vq_forward.1} parent=5 // pred_fallthru
        _
      %p1510 = scmp.le.s32.totalorder 2, %s21
      // Predicated region
      $region214: #{_multi_vq_forward.1} parent=5 // pred_check
        %p1511 = pneg %p1510
      $region215: #{_multi_vq_forward.1} parent=5 // pred_check_branch
        %1513 = sbr.rel (%p1511) target = $region217
      $region216: #{_multi_vq_forward.1} parent=5 // pred_region
        %s1514 = ssub.s32 %s21, 2
        // Predicated region
        $region218: #{_multi_vq_forward.1} parent=216 // pred_check
          %p1515 = pneg %p113
        $region219: #{_multi_vq_forward.1} parent=216 // pred_check_branch
          %1517 = sbr.rel (%p1515) target = $region221
        $region220: #{_multi_vq_forward.1} parent=216 // pred_region
          %s1518 = sand.u32 %s98, 1
          %s1519 = sand.u32 %s98, 1
          %s1520 = smul.addr %s1519, 32
          %s1521 = scalar_lea.vmem [#allocation11], %s1520
        $region221: #{_multi_vq_forward.1} parent=216 // pred_fallthru
          _
      $region217: #{_multi_vq_forward.1} parent=5 // pred_fallthru
        _
    $region6: #{_multi_vq_forward.1} parent=1 // loop_footer
      %s25 = sadd.s32 1, %s21
    $region7: #{_multi_vq_forward.1} parent=1 // loop_footer_branch
      %20 = sbr.rel target = $region3
    $region8: #{_multi_vq_forward.1} parent=1 // loop_exit
      _
    %1522 = vsyncpa [#allocation8], 1
    %s1523 = scalar_lea.sflag [#allocation8], 1
    %1524 = vsyncpa %s1523, 1
    %1525 = vsyncpa [#allocation14], 1
    %1526 = vsyncpa [#allocation17], 1
    %1527 = vsyncpa [#allocation9], 1
    %s1528 = scalar_lea.sflag [#allocation9], 1
    %1529 = vsyncpa %s1528, 1
  %1530 = vsyncmov [#allocation6]
  %s1531 = vpop.sfrf %1530
  %p1532 = scmp.eq.s32.totalorder %s1531, 0
  %p1533 = pneg %p1532
  %1535 = shalt.err (%p1533)
  %s1536 = scalar_lea.sflag [#allocation6], 1
  %1537 = vsyncmov %s1536
  %s1538 = vpop.sfrf %1537
  %p1539 = scmp.eq.s32.totalorder %s1538, 0
  %p1540 = pneg %p1539
  %1542 = shalt.err (%p1540)
  %s1543 = scalar_lea.sflag [#allocation6], 2
  %1544 = vsyncmov %s1543
  %s1545 = vpop.sfrf %1544
  %p1546 = scmp.eq.s32.totalorder %s1545, 0
  %p1547 = pneg %p1546
  %1549 = shalt.err (%p1547)

</llo_original>
